<compile_context>
chip_gen: v7x
topology: tpu7x:2x2x1
jax: 0.10.0
libtpu: 0.0.40
codegen_flags: <defaults>
</compile_context>

<pallas_src>
import numpy as np
import jax
import jax.numpy as jnp
from jax.experimental import pallas as pl
from jax.experimental.pallas import tpu as pltpu

BN_EPS = 1e-5


# ----------------------------- Pallas kernel ------------------------------- #

def _make_fused_kernel(num_layers):
    """Fused kernel: all attention layers + final label attention.

    Ref order:
      x:        (B, L, D)
      aw_i:     (os_i, D)   attention weights (PyTorch layout, contract dim 1)
      hw_i:     (H_i, D_i)  hidden weights    (PyTorch layout, contract dim 1)
      lab:      (C, H)      labDescVec        (PyTorch layout, contract dim 1)
      slab:     (rows, W)   packed [hb, gamma, beta] rows, 3 per layer
      out:      (B, C, H)
    """

    def kernel(*refs):
        x_ref = refs[0]
        aw_refs = refs[1:1 + num_layers]
        hw_refs = refs[1 + num_layers:1 + 2 * num_layers]
        lab_ref = refs[1 + 2 * num_layers]
        slab_ref = refs[2 + 2 * num_layers]
        out_ref = refs[3 + 2 * num_layers]

        x = x_ref[...]                              # (B, L, D) f32
        slab = slab_ref[...]                        # (rows, W) f32
        B = x.shape[0]

        for li in range(num_layers):
            aw = aw_refs[li][...]                   # (os, D)
            hw = hw_refs[li][...]                   # (H, D)
            os_ = aw.shape[0]
            H = hw.shape[0]

            # --- attention logits, lane-dense over the seq axis: (B, os, L) ---
            # NOTE: the attention Linear's bias is constant along the
            # softmax-reduced (seq) axis, so it cancels exactly; skipped.
            logits = jnp.einsum('bld,od->bol', x, aw,
                                preferred_element_type=jnp.float32)

            # --- softmax over the seq axis (last axis here == PyTorch dim=1) ---
            m = jnp.max(logits, axis=-1, keepdims=True)
            e = jnp.exp(logits - m)
            denom = jnp.sum(e, axis=-1, keepdims=True)
            alpha = e / denom                       # exact divide (correctness)

            # --- pooled = alpha^T @ X, single batched contraction over L ---
            pooled = jnp.einsum('bol,bld->bod', alpha, x,
                                preferred_element_type=jnp.float32)  # (B,os,D)

            # --- hidden linear over all (B*os) rows at once ---
            n = B * os_
            h = jnp.einsum('bod,hd->boh', pooled, hw,
                           preferred_element_type=jnp.float32)
            h = h.reshape(n, H) + slab[3 * li + 0:3 * li + 1, :H]

            # --- BatchNorm1d: batch stats over all (B*os) rows, per channel ---
            mean = jnp.sum(h, axis=0, keepdims=True) * (1.0 / n)
            cent = h - mean
            var = jnp.sum(cent * cent, axis=0, keepdims=True) * (1.0 / n)
            inv_std = 1.0 / jnp.sqrt(var + BN_EPS)
            y = cent * (inv_std * slab[3 * li + 1:3 * li + 2, :H]) \
                + slab[3 * li + 2:3 * li + 3, :H]

            # --- ReLU; dropout = identity (eval mode) ---
            x = jnp.maximum(y, 0.0).reshape(B, os_, H)

        # --- final label-description attention ---
        # scores computed lane-dense as (B, C, Of); softmax over Of (the
        # "row" axis of X @ labDescVec^T, i.e. PyTorch dim=1).
        lab = lab_ref[...]                          # (C, H)
        scores = jnp.einsum('boh,ch->bco', x, lab,
                            preferred_element_type=jnp.float32)
        m = jnp.max(scores, axis=-1, keepdims=True)
        e = jnp.exp(scores - m)
        denom = jnp.sum(e, axis=-1, keepdims=True)
        alpha = e / denom                           # (B, C, Of) exact divide

        # Single lane-dense (H=128) store of the whole output.
        out_ref[...] = jnp.einsum('bco,boh->bch', alpha, x,
                                  preferred_element_type=jnp.float32)

    return kernel


# ------------------------------ JAX wrapper -------------------------------- #

def _pack_param_slab(layer_params):
    """Pack (hb, gamma, beta) for every layer into one (rows, W) f32 slab."""
    num_layers = len(layer_params)
    max_w = max(p[2].shape[0] for p in layer_params)           # widest H
    w_pad = ((max_w + 127) // 128) * 128
    rows = 3 * num_layers
    rows_pad = ((rows + 7) // 8) * 8
    slab = np.zeros((rows_pad, w_pad), np.float32)
    for i, (_aw, _ab, hw, hb, g, b) in enumerate(layer_params):
        h = hw.shape[0]
        slab[3 * i + 0, :h] = np.asarray(hb)
        slab[3 * i + 1, :h] = np.asarray(g)
        slab[3 * i + 2, :h] = np.asarray(b)
    return jnp.asarray(slab)


def deep_icd_desc_attention(x, layer_params, lab_desc_vec):
    """Single fused pallas_call for the whole module forward."""
    num_layers = len(layer_params)
    B = x.shape[0]
    C = lab_desc_vec.shape[0]
    H = layer_params[-1][2].shape[0]          # last hidden output dim

    aws = [p[0] for p in layer_params]
    hws = [p[2] for p in layer_params]
    slab = _pack_param_slab(layer_params)

    inputs = [x, *aws, *hws, lab_desc_vec, slab]

    vmem = pl.BlockSpec(memory_space=pltpu.MemorySpace.VMEM)
    return pl.pallas_call(
        _make_fused_kernel(num_layers),
        out_shape=jax.ShapeDtypeStruct((B, C, H), jnp.float32),
        in_specs=[vmem] * len(inputs),
        out_specs=vmem,
    )(*inputs)


# ------------------------ deterministic parameter init ---------------------- #

def init_params(key, in_size, lab_size, attn_list, class_num):
    params = []
    d = in_size
    for i, os_ in enumerate(attn_list):
        key, k1, k2, k3, k4 = jax.random.split(key, 5)
        h_out = lab_size if i == len(attn_list) - 1 else d
        aw = 0.1 * jax.random.normal(k1, (os_, d), jnp.float32)    # Linear(d, os)
        ab = 0.1 * jax.random.normal(k2, (os_,), jnp.float32)      # cancels in softmax
        hw = 0.1 * jax.random.normal(k3, (h_out, d), jnp.float32)  # Linear(d, h_out)
        hb = 0.1 * jax.random.normal(k4, (h_out,), jnp.float32)
        gamma = jnp.ones((h_out,), jnp.float32)                    # BN affine defaults
        beta = jnp.zeros((h_out,), jnp.float32)
        params.append((aw, ab, hw, hb, gamma, beta))
        d = h_out
    key, kl = jax.random.split(key)
    lab_desc_vec = 0.1 * jax.random.normal(kl, (class_num, lab_size), jnp.float32)
    return params, lab_desc_vec


# ------------------------------- pure-JAX ref ------------------------------- #

def reference(x, layer_params, lab_desc_vec):
    for (aw, ab, hw, hb, g, b) in layer_params:
        logits = jnp.einsum('bld,od->blo', x, aw) + ab
        alpha = jax.nn.softmax(logits, axis=1)
        x = jnp.einsum('blo,bld->bod', alpha, x)
        x = jnp.einsum('bod,hd->boh', x, hw) + hb
        mean = jnp.mean(x, axis=(0, 1), keepdims=True)
        var = jnp.mean((x - mean) ** 2, axis=(0, 1), keepdims=True)
        x = (x - mean) / jnp.sqrt(var + BN_EPS) * g + b
        x = jnp.maximum(x, 0.0)
    scores = jnp.einsum('boh,ch->boc', x, lab_desc_vec)
    alpha = jax.nn.softmax(scores, axis=1)
    return jnp.einsum('boc,boh->bch', alpha, x)


# ----------------------------------- main ----------------------------------- #

if __name__ == "__main__":
    # Small but TPU-friendly shapes (feature dims lane-dense, row counts
    # multiples of 8 so in-kernel reshapes are layout-preserving).
    B, L = 2, 16            # batch, sequence length
    in_size = 128
    attn_list = [16, 8]
    lab_size = 128
    class_num = 16

    key = jax.random.PRNGKey(0)
    key, kx = jax.random.split(key)
    x = jax.random.normal(kx, (B, L, in_size), jnp.float32)

    layer_params, lab_desc_vec = init_params(key, in_size, lab_size,
                                             attn_list, class_num)

    out = deep_icd_desc_attention(x, layer_params, lab_desc_vec)
    out = jax.block_until_ready(out)

    ref = jax.block_until_ready(reference(x, layer_params, lab_desc_vec))

    assert out.shape == (B, class_num, lab_size), out.shape
    # Exact softmax divides -> tight agreement with the reference.
    assert jnp.allclose(out, ref, rtol=1e-4, atol=1e-4), (
        float(jnp.max(jnp.abs(out - ref))))

    print("KERNEL_OK")
</pallas_src>

<mosaic_0001>
module attributes {stable_mosaic.version = 11 : i64} {
  func.func @kernel(%arg0: memref<2x16x128xf32, #tpu.memory_space<vmem>>, %arg1: memref<16x128xf32, #tpu.memory_space<vmem>>, %arg2: memref<8x128xf32, #tpu.memory_space<vmem>>, %arg3: memref<128x128xf32, #tpu.memory_space<vmem>>, %arg4: memref<128x128xf32, #tpu.memory_space<vmem>>, %arg5: memref<16x128xf32, #tpu.memory_space<vmem>>, %arg6: memref<8x128xf32, #tpu.memory_space<vmem>>, %arg7: memref<2x16x128xf32, #tpu.memory_space<vmem>>) attributes {dimension_semantics = [], scalar_prefetch = 0 : i64, scratch_operands = 0 : i64, tpu.core_type = #tpu.core_type<tc>} {
    %c0 = arith.constant 0 : index
    %c0_0 = arith.constant 0 : index
    %c0_1 = arith.constant 0 : index
    %0 = vector.load %arg0[%c0, %c0_0, %c0_1] : memref<2x16x128xf32, #tpu.memory_space<vmem>>, vector<2x16x128xf32>
    %c0_2 = arith.constant 0 : index
    %c0_3 = arith.constant 0 : index
    %1 = vector.load %arg6[%c0_2, %c0_3] : memref<8x128xf32, #tpu.memory_space<vmem>>, vector<8x128xf32>
    %c0_4 = arith.constant 0 : index
    %c0_5 = arith.constant 0 : index
    %2 = vector.load %arg1[%c0_4, %c0_5] : memref<16x128xf32, #tpu.memory_space<vmem>>, vector<16x128xf32>
    %c0_6 = arith.constant 0 : index
    %c0_7 = arith.constant 0 : index
    %3 = vector.load %arg3[%c0_6, %c0_7] : memref<128x128xf32, #tpu.memory_space<vmem>>, vector<128x128xf32>
    "tpu.trace_start"() <{level = 10 : i32, message = "bld,od->bol"}> : () -> ()
    %cst = arith.constant dense<0.000000e+00> : vector<16x2x16xf32>
    %4 = tpu.matmul %2, %0, %cst {dimension_numbers = #tpu.dot_dimension_numbers<[1], [2], [0], [0, 1], [0, 0, 1, 0, 1, 1], [], []>} : vector<16x128xf32>, vector<2x16x128xf32>, vector<16x2x16xf32> -> vector<16x2x16xf32>
    %5 = tpu.transpose %4, [1, 0, 2] : vector<16x2x16xf32> -> vector<2x16x16xf32>
    "tpu.trace_stop"() : () -> ()
    %cst_8 = arith.constant dense<0xFF800000> : vector<2x16xf32>
    %6 = vector.multi_reduction <maximumf>, %5, %cst_8 [2] : vector<2x16x16xf32> to vector<2x16xf32>
    %7 = vector.shape_cast %6 : vector<2x16xf32> to vector<2x16x1xf32>
    %8 = vector.broadcast %7 : vector<2x16x1xf32> to vector<2x16x16xf32>
    %9 = arith.subf %5, %8 : vector<2x16x16xf32>
    %10 = math.exp %9 : vector<2x16x16xf32>
    %cst_9 = arith.constant dense<0.000000e+00> : vector<2x16xf32>
    %11 = vector.multi_reduction <add>, %10, %cst_9 [2] : vector<2x16x16xf32> to vector<2x16xf32>
    %12 = vector.shape_cast %11 : vector<2x16xf32> to vector<2x16x1xf32>
    %13 = vector.broadcast %12 : vector<2x16x1xf32> to vector<2x16x16xf32>
    %14 = arith.divf %10, %13 : vector<2x16x16xf32>
    "tpu.trace_start"() <{level = 10 : i32, message = "bol,bld->bod"}> : () -> ()
    %cst_10 = arith.constant dense<0.000000e+00> : vector<2x16x128xf32>
    %15 = tpu.matmul %14, %0, %cst_10 {dimension_numbers = #tpu.dot_dimension_numbers<[2], [1], [1], [2], [0, 0, 0, 1, 1, 2], [0], [0]>} : vector<2x16x16xf32>, vector<2x16x128xf32>, vector<2x16x128xf32> -> vector<2x16x128xf32>
    "tpu.trace_stop"() : () -> ()
    "tpu.trace_start"() <{level = 10 : i32, message = "bod,hd->boh"}> : () -> ()
    %cst_11 = arith.constant dense<0.000000e+00> : vector<2x16x128xf32>
    %16 = tpu.matmul %15, %3, %cst_11 {dimension_numbers = #tpu.dot_dimension_numbers<[2], [1], [0, 1], [0], [0, 0, 0, 1, 1, 0], [], []>} : vector<2x16x128xf32>, vector<128x128xf32>, vector<2x16x128xf32> -> vector<2x16x128xf32>
    "tpu.trace_stop"() : () -> ()
    %17 = vector.shape_cast %16 : vector<2x16x128xf32> to vector<32x128xf32>
    %18 = vector.extract_strided_slice %1 {offsets = [0, 0], sizes = [1, 128], strides = [1, 1]} : vector<8x128xf32> to vector<1x128xf32>
    %19 = vector.broadcast %18 : vector<1x128xf32> to vector<32x128xf32>
    %20 = arith.addf %17, %19 : vector<32x128xf32>
    %cst_12 = arith.constant dense<0.000000e+00> : vector<128xf32>
    %21 = vector.multi_reduction <add>, %20, %cst_12 [0] : vector<32x128xf32> to vector<128xf32>
    %22 = vector.shape_cast %21 : vector<128xf32> to vector<1x128xf32>
    %cst_13 = arith.constant 3.125000e-02 : f32
    %23 = vector.broadcast %cst_13 : f32 to vector<1x128xf32>
    %24 = arith.mulf %22, %23 : vector<1x128xf32>
    %25 = vector.broadcast %24 : vector<1x128xf32> to vector<32x128xf32>
    %26 = arith.subf %20, %25 : vector<32x128xf32>
    %27 = arith.mulf %26, %26 : vector<32x128xf32>
    %cst_14 = arith.constant dense<0.000000e+00> : vector<128xf32>
    %28 = vector.multi_reduction <add>, %27, %cst_14 [0] : vector<32x128xf32> to vector<128xf32>
    %29 = vector.shape_cast %28 : vector<128xf32> to vector<1x128xf32>
    %cst_15 = arith.constant 3.125000e-02 : f32
    %30 = vector.broadcast %cst_15 : f32 to vector<1x128xf32>
    %31 = arith.mulf %29, %30 : vector<1x128xf32>
    %cst_16 = arith.constant 9.99999974E-6 : f32
    %32 = vector.broadcast %cst_16 : f32 to vector<1x128xf32>
    %33 = arith.addf %31, %32 : vector<1x128xf32>
    %34 = math.sqrt %33 : vector<1x128xf32>
    %cst_17 = arith.constant 1.000000e+00 : f32
    %35 = vector.broadcast %cst_17 : f32 to vector<1x128xf32>
    %36 = arith.divf %35, %34 : vector<1x128xf32>
    %37 = vector.extract_strided_slice %1 {offsets = [1, 0], sizes = [1, 128], strides = [1, 1]} : vector<8x128xf32> to vector<1x128xf32>
    %38 = arith.mulf %36, %37 : vector<1x128xf32>
    %39 = vector.broadcast %38 : vector<1x128xf32> to vector<32x128xf32>
    %40 = arith.mulf %26, %39 : vector<32x128xf32>
    %41 = vector.extract_strided_slice %1 {offsets = [2, 0], sizes = [1, 128], strides = [1, 1]} : vector<8x128xf32> to vector<1x128xf32>
    %42 = vector.broadcast %41 : vector<1x128xf32> to vector<32x128xf32>
    %43 = arith.addf %40, %42 : vector<32x128xf32>
    %cst_18 = arith.constant 0.000000e+00 : f32
    %44 = vector.broadcast %cst_18 : f32 to vector<32x128xf32>
    %45 = arith.maximumf %43, %44 : vector<32x128xf32>
    %46 = vector.shape_cast %45 : vector<32x128xf32> to vector<2x16x128xf32>
    %c0_19 = arith.constant 0 : index
    %c0_20 = arith.constant 0 : index
    %47 = vector.load %arg2[%c0_19, %c0_20] : memref<8x128xf32, #tpu.memory_space<vmem>>, vector<8x128xf32>
    %c0_21 = arith.constant 0 : index
    %c0_22 = arith.constant 0 : index
    %48 = vector.load %arg4[%c0_21, %c0_22] : memref<128x128xf32, #tpu.memory_space<vmem>>, vector<128x128xf32>
    "tpu.trace_start"() <{level = 10 : i32, message = "bld,od->bol"}> : () -> ()
    %cst_23 = arith.constant dense<0.000000e+00> : vector<8x2x16xf32>
    %49 = tpu.matmul %47, %46, %cst_23 {dimension_numbers = #tpu.dot_dimension_numbers<[1], [2], [0], [0, 1], [0, 0, 1, 0, 1, 1], [], []>} : vector<8x128xf32>, vector<2x16x128xf32>, vector<8x2x16xf32> -> vector<8x2x16xf32>
    %50 = tpu.transpose %49, [1, 0, 2] : vector<8x2x16xf32> -> vector<2x8x16xf32>
    "tpu.trace_stop"() : () -> ()
    %cst_24 = arith.constant dense<0xFF800000> : vector<2x8xf32>
    %51 = vector.multi_reduction <maximumf>, %50, %cst_24 [2] : vector<2x8x16xf32> to vector<2x8xf32>
    %52 = vector.shape_cast %51 : vector<2x8xf32> to vector<2x8x1xf32>
    %53 = vector.broadcast %52 : vector<2x8x1xf32> to vector<2x8x16xf32>
    %54 = arith.subf %50, %53 : vector<2x8x16xf32>
    %55 = math.exp %54 : vector<2x8x16xf32>
    %cst_25 = arith.constant dense<0.000000e+00> : vector<2x8xf32>
    %56 = vector.multi_reduction <add>, %55, %cst_25 [2] : vector<2x8x16xf32> to vector<2x8xf32>
    %57 = vector.shape_cast %56 : vector<2x8xf32> to vector<2x8x1xf32>
    %58 = vector.broadcast %57 : vector<2x8x1xf32> to vector<2x8x16xf32>
    %59 = arith.divf %55, %58 : vector<2x8x16xf32>
    "tpu.trace_start"() <{level = 10 : i32, message = "bol,bld->bod"}> : () -> ()
    %cst_26 = arith.constant dense<0.000000e+00> : vector<2x8x128xf32>
    %60 = tpu.matmul %59, %46, %cst_26 {dimension_numbers = #tpu.dot_dimension_numbers<[2], [1], [1], [2], [0, 0, 0, 1, 1, 2], [0], [0]>} : vector<2x8x16xf32>, vector<2x16x128xf32>, vector<2x8x128xf32> -> vector<2x8x128xf32>
    "tpu.trace_stop"() : () -> ()
    "tpu.trace_start"() <{level = 10 : i32, message = "bod,hd->boh"}> : () -> ()
    %cst_27 = arith.constant dense<0.000000e+00> : vector<2x8x128xf32>
    %61 = tpu.matmul %60, %48, %cst_27 {dimension_numbers = #tpu.dot_dimension_numbers<[2], [1], [0, 1], [0], [0, 0, 0, 1, 1, 0], [], []>} : vector<2x8x128xf32>, vector<128x128xf32>, vector<2x8x128xf32> -> vector<2x8x128xf32>
    "tpu.trace_stop"() : () -> ()
    %62 = vector.shape_cast %61 : vector<2x8x128xf32> to vector<16x128xf32>
    %63 = vector.extract_strided_slice %1 {offsets = [3, 0], sizes = [1, 128], strides = [1, 1]} : vector<8x128xf32> to vector<1x128xf32>
    %64 = vector.broadcast %63 : vector<1x128xf32> to vector<16x128xf32>
    %65 = arith.addf %62, %64 : vector<16x128xf32>
    %cst_28 = arith.constant dense<0.000000e+00> : vector<128xf32>
    %66 = vector.multi_reduction <add>, %65, %cst_28 [0] : vector<16x128xf32> to vector<128xf32>
    %67 = vector.shape_cast %66 : vector<128xf32> to vector<1x128xf32>
    %cst_29 = arith.constant 6.250000e-02 : f32
    %68 = vector.broadcast %cst_29 : f32 to vector<1x128xf32>
    %69 = arith.mulf %67, %68 : vector<1x128xf32>
    %70 = vector.broadcast %69 : vector<1x128xf32> to vector<16x128xf32>
    %71 = arith.subf %65, %70 : vector<16x128xf32>
    %72 = arith.mulf %71, %71 : vector<16x128xf32>
    %cst_30 = arith.constant dense<0.000000e+00> : vector<128xf32>
    %73 = vector.multi_reduction <add>, %72, %cst_30 [0] : vector<16x128xf32> to vector<128xf32>
    %74 = vector.shape_cast %73 : vector<128xf32> to vector<1x128xf32>
    %cst_31 = arith.constant 6.250000e-02 : f32
    %75 = vector.broadcast %cst_31 : f32 to vector<1x128xf32>
    %76 = arith.mulf %74, %75 : vector<1x128xf32>
    %cst_32 = arith.constant 9.99999974E-6 : f32
    %77 = vector.broadcast %cst_32 : f32 to vector<1x128xf32>
    %78 = arith.addf %76, %77 : vector<1x128xf32>
    %79 = math.sqrt %78 : vector<1x128xf32>
    %cst_33 = arith.constant 1.000000e+00 : f32
    %80 = vector.broadcast %cst_33 : f32 to vector<1x128xf32>
    %81 = arith.divf %80, %79 : vector<1x128xf32>
    %82 = vector.extract_strided_slice %1 {offsets = [4, 0], sizes = [1, 128], strides = [1, 1]} : vector<8x128xf32> to vector<1x128xf32>
    %83 = arith.mulf %81, %82 : vector<1x128xf32>
    %84 = vector.broadcast %83 : vector<1x128xf32> to vector<16x128xf32>
    %85 = arith.mulf %71, %84 : vector<16x128xf32>
    %86 = vector.extract_strided_slice %1 {offsets = [5, 0], sizes = [1, 128], strides = [1, 1]} : vector<8x128xf32> to vector<1x128xf32>
    %87 = vector.broadcast %86 : vector<1x128xf32> to vector<16x128xf32>
    %88 = arith.addf %85, %87 : vector<16x128xf32>
    %cst_34 = arith.constant 0.000000e+00 : f32
    %89 = vector.broadcast %cst_34 : f32 to vector<16x128xf32>
    %90 = arith.maximumf %88, %89 : vector<16x128xf32>
    %91 = vector.shape_cast %90 : vector<16x128xf32> to vector<2x8x128xf32>
    %c0_35 = arith.constant 0 : index
    %c0_36 = arith.constant 0 : index
    %92 = vector.load %arg5[%c0_35, %c0_36] : memref<16x128xf32, #tpu.memory_space<vmem>>, vector<16x128xf32>
    "tpu.trace_start"() <{level = 10 : i32, message = "boh,ch->bco"}> : () -> ()
    %cst_37 = arith.constant dense<0.000000e+00> : vector<16x2x8xf32>
    %93 = tpu.matmul %92, %91, %cst_37 {dimension_numbers = #tpu.dot_dimension_numbers<[1], [2], [0], [0, 1], [0, 0, 1, 0, 1, 1], [], []>} : vector<16x128xf32>, vector<2x8x128xf32>, vector<16x2x8xf32> -> vector<16x2x8xf32>
    %94 = tpu.transpose %93, [1, 0, 2] : vector<16x2x8xf32> -> vector<2x16x8xf32>
    "tpu.trace_stop"() : () -> ()
    %cst_38 = arith.constant dense<0xFF800000> : vector<2x16xf32>
    %95 = vector.multi_reduction <maximumf>, %94, %cst_38 [2] : vector<2x16x8xf32> to vector<2x16xf32>
    %96 = vector.shape_cast %95 : vector<2x16xf32> to vector<2x16x1xf32>
    %97 = vector.broadcast %96 : vector<2x16x1xf32> to vector<2x16x8xf32>
    %98 = arith.subf %94, %97 : vector<2x16x8xf32>
    %99 = math.exp %98 : vector<2x16x8xf32>
    %cst_39 = arith.constant dense<0.000000e+00> : vector<2x16xf32>
    %100 = vector.multi_reduction <add>, %99, %cst_39 [2] : vector<2x16x8xf32> to vector<2x16xf32>
    %101 = vector.shape_cast %100 : vector<2x16xf32> to vector<2x16x1xf32>
    %102 = vector.broadcast %101 : vector<2x16x1xf32> to vector<2x16x8xf32>
    %103 = arith.divf %99, %102 : vector<2x16x8xf32>
    "tpu.trace_start"() <{level = 10 : i32, message = "bco,boh->bch"}> : () -> ()
    %cst_40 = arith.constant dense<0.000000e+00> : vector<2x16x128xf32>
    %104 = tpu.matmul %103, %91, %cst_40 {dimension_numbers = #tpu.dot_dimension_numbers<[2], [1], [1], [2], [0, 0, 0, 1, 1, 2], [0], [0]>} : vector<2x16x8xf32>, vector<2x8x128xf32>, vector<2x16x128xf32> -> vector<2x16x128xf32>
    "tpu.trace_stop"() : () -> ()
    %c0_41 = arith.constant 0 : index
    %c0_42 = arith.constant 0 : index
    %c0_43 = arith.constant 0 : index
    %105 = vector.load %arg7[%c0_41, %c0_42, %c0_43] : memref<2x16x128xf32, #tpu.memory_space<vmem>>, vector<2x16x128xf32>
    tpu.vector_store %arg7[%c0_41, %c0_42, %c0_43], %104 {strides = array<i32>} : memref<2x16x128xf32, #tpu.memory_space<vmem>>, vector<2x16x128xf32>,
    return
  }
}

</mosaic_0001>

<llo_original>
// kernel: tpu_custom_call.1
$region0: #{tpu_custom_call.1}
  #allocation0 [shape = 'u32[]', space=smem, size = 0x4, offset = 0x4, fixed_abs, tag = 'smem constant byte address 0x4 - core index']
  #allocation1 [shape = 'u32[144,128]{1,0:T(1,128)}', space=vmem, size = 0x12000, scoped, tag = 'internal scratch']
  %s0 = inlined_call_operand.hbm [shape: f32[2,16,128], index: 0, kind: input, shape index: {}]
  %s1 = inlined_call_operand.hbm [shape: f32[16,128], index: 1, kind: input, shape index: {}]
  %s2 = inlined_call_operand.hbm [shape: f32[8,128], index: 2, kind: input, shape index: {}]
  %s3 = inlined_call_operand.hbm [shape: f32[128,128], index: 3, kind: input, shape index: {}]
  %s4 = inlined_call_operand.hbm [shape: f32[128,128], index: 4, kind: input, shape index: {}]
  %s5 = inlined_call_operand.vmem [shape: f32[16,128], index: 5, kind: input, shape index: {}]
  %s6 = inlined_call_operand.hbm [shape: f32[8,128], index: 6, kind: input, shape index: {}]
  %s7 = inlined_call_operand.hbm [shape: f32[2,16,128], index: 7, kind: output, shape index: {}]
  %s8 = sld [smem:[#allocation0]]
  $region62: #{tpu_custom_call.1} parent=0
    _
  %s10 = ssub.s32 1, %s8
  %s11 = scalar_select 0, %s10, %s8
  $region1: #{tpu_custom_call.1} parent=0
    #allocation2 [shape = 'u8[16384]{0}', space=vmem, size = 0x4000, scoped, tag = 'input window, operand 0, single buffered']
    #allocation3 [shape = 's32[1]{0}', space=sflag, size = 0x4, scoped, tag = 'scoped memory for tpu_custom_call.1']
    #allocation4 [shape = 's32[1]{0}', space=sflag, size = 0x4, scoped, tag = 'scoped memory for tpu_custom_call.1']
    #allocation5 [shape = 'u8[8192]{0}', space=vmem, size = 0x2000, scoped, tag = 'input window, operand 1, single buffered']
    #allocation6 [shape = 's32[1]{0}', space=sflag, size = 0x4, scoped, tag = 'scoped memory for tpu_custom_call.1']
    #allocation7 [shape = 'u8[4096]{0}', space=vmem, size = 0x1000, scoped, tag = 'input window, operand 2, single buffered']
    #allocation8 [shape = 'u8[65536]{0}', space=vmem, size = 0x10000, scoped, tag = 'input window, operand 3, single buffered']
    #allocation9 [shape = 's32[1]{0}', space=sflag, size = 0x4, scoped, tag = 'scoped memory for tpu_custom_call.1']
    #allocation10 [shape = 'u8[65536]{0}', space=vmem, size = 0x10000, scoped, tag = 'input window, operand 4, single buffered']
    #allocation11 [shape = 'u8[4096]{0}', space=vmem, size = 0x1000, scoped, tag = 'input window, operand 6, single buffered']
    #allocation12 [shape = 's32[1]{0}', space=sflag, size = 0x4, scoped, tag = 'scoped memory for tpu_custom_call.1']
    #allocation13 [shape = 'u8[16384]{0}', space=vmem, size = 0x4000, scoped, tag = 'output window, operand 0, single buffered']
    %12 = vsyncpa [#allocation3], 0
    %13 = vsyncpa [#allocation6], 0
    %14 = vsyncpa [#allocation9], 0
    %15 = vsyncpa [#allocation12], 0
    %16 = vsyncpa [#allocation4], 0
    // Predicated region
    $region2: #{tpu_custom_call.1} parent=1 // pred_check
      _
    $region3: #{tpu_custom_call.1} parent=1 // pred_check_branch
      %18 = sbr.rel (0) target = $region5
    $region4: #{tpu_custom_call.1} parent=1 // pred_region
      %s20 = ssub.s32 512, 512
      %21 = vsyncadd [#allocation3], %s20
      %s22 = sshll.u32 [#allocation2], 4
      %s23 = int_to_ptr.vmem [resolvable:$true] %s22
      %28 = dma.hbm_to_vmem [thread:$0]  %s0, 512, %s23, [#allocation3], 128, 128, 8
    $region5: #{tpu_custom_call.1} parent=1 // pred_fallthru
      _
    // Predicated region
    $region6: #{tpu_custom_call.1} parent=1 // pred_check
      _
    $region7: #{tpu_custom_call.1} parent=1 // pred_check_branch
      %30 = sbr.rel (0) target = $region9
    $region8: #{tpu_custom_call.1} parent=1 // pred_region
      %s32 = ssub.s32 256, 256
      %33 = vsyncadd [#allocation6], %s32
      %s34 = sshll.u32 [#allocation5], 4
      %s35 = int_to_ptr.vmem [resolvable:$true] %s34
      %40 = dma.hbm_to_vmem [thread:$0]  %s1, 256, %s35, [#allocation6], 128, 128, 8
    $region9: #{tpu_custom_call.1} parent=1 // pred_fallthru
      _
    // Predicated region
    $region10: #{tpu_custom_call.1} parent=1 // pred_check
      _
    $region11: #{tpu_custom_call.1} parent=1 // pred_check_branch
      %42 = sbr.rel (0) target = $region13
    $region12: #{tpu_custom_call.1} parent=1 // pred_region
      %s44 = ssub.s32 128, 128
      %45 = vsyncadd [#allocation6], %s44
      %s47 = sshll.u32 [#allocation7], 4
      %s48 = int_to_ptr.vmem [resolvable:$true] %s47
      %50 = dma.hbm_to_vmem [thread:$0]  %s2, 128, %s48, [#allocation6]
    $region13: #{tpu_custom_call.1} parent=1 // pred_fallthru
      _
    // Predicated region
    $region14: #{tpu_custom_call.1} parent=1 // pred_check
      _
    $region15: #{tpu_custom_call.1} parent=1 // pred_check_branch
      %52 = sbr.rel (0) target = $region17
    $region16: #{tpu_custom_call.1} parent=1 // pred_region
      %s54 = ssub.s32 2048, 2048
      %55 = vsyncadd [#allocation9], %s54
      %s56 = sshll.u32 [#allocation8], 4
      %s57 = int_to_ptr.vmem [resolvable:$true] %s56
      %62 = dma.hbm_to_vmem [thread:$0]  %s3, 2048, %s57, [#allocation9], 128, 128, 8
    $region17: #{tpu_custom_call.1} parent=1 // pred_fallthru
      _
    // Predicated region
    $region18: #{tpu_custom_call.1} parent=1 // pred_check
      _
    $region19: #{tpu_custom_call.1} parent=1 // pred_check_branch
      %64 = sbr.rel (0) target = $region21
    $region20: #{tpu_custom_call.1} parent=1 // pred_region
      %s66 = ssub.s32 2048, 2048
      %67 = vsyncadd [#allocation9], %s66
      %s68 = sshll.u32 [#allocation10], 4
      %s69 = int_to_ptr.vmem [resolvable:$true] %s68
      %74 = dma.hbm_to_vmem [thread:$0]  %s4, 2048, %s69, [#allocation9], 128, 128, 8
    $region21: #{tpu_custom_call.1} parent=1 // pred_fallthru
      _
    // Predicated region
    $region22: #{tpu_custom_call.1} parent=1 // pred_check
      _
    $region23: #{tpu_custom_call.1} parent=1 // pred_check_branch
      %76 = sbr.rel (0) target = $region25
    $region24: #{tpu_custom_call.1} parent=1 // pred_region
      _
    $region25: #{tpu_custom_call.1} parent=1 // pred_fallthru
      _
    // Predicated region
    $region26: #{tpu_custom_call.1} parent=1 // pred_check
      _
    $region27: #{tpu_custom_call.1} parent=1 // pred_check_branch
      %78 = sbr.rel (0) target = $region29
    $region28: #{tpu_custom_call.1} parent=1 // pred_region
      %s80 = ssub.s32 128, 128
      %81 = vsyncadd [#allocation12], %s80
      %s83 = sshll.u32 [#allocation11], 4
      %s84 = int_to_ptr.vmem [resolvable:$true] %s83
      %86 = dma.hbm_to_vmem [thread:$0]  %s6, 128, %s84, [#allocation12]
    $region29: #{tpu_custom_call.1} parent=1 // pred_fallthru
      _
    // Predicated region
    $region30: #{tpu_custom_call.1} parent=1 // pred_check
      _
    $region31: #{tpu_custom_call.1} parent=1 // pred_check_branch
      %88 = sbr.rel (0) target = $region33
    $region32: #{tpu_custom_call.1} parent=1 // pred_region
      %89 = dma.done [#allocation3], 512
    $region33: #{tpu_custom_call.1} parent=1 // pred_fallthru
      _
    // Predicated region
    $region34: #{tpu_custom_call.1} parent=1 // pred_check
      _
    $region35: #{tpu_custom_call.1} parent=1 // pred_check_branch
      %91 = sbr.rel (0) target = $region37
    $region36: #{tpu_custom_call.1} parent=1 // pred_region
      %92 = dma.done [#allocation6], 256
    $region37: #{tpu_custom_call.1} parent=1 // pred_fallthru
      _
    // Predicated region
    $region38: #{tpu_custom_call.1} parent=1 // pred_check
      _
    $region39: #{tpu_custom_call.1} parent=1 // pred_check_branch
      %94 = sbr.rel (0) target = $region41
    $region40: #{tpu_custom_call.1} parent=1 // pred_region
      %95 = dma.done [#allocation6], 128
    $region41: #{tpu_custom_call.1} parent=1 // pred_fallthru
      _
    // Predicated region
    $region42: #{tpu_custom_call.1} parent=1 // pred_check
      _
    $region43: #{tpu_custom_call.1} parent=1 // pred_check_branch
      %97 = sbr.rel (0) target = $region45
    $region44: #{tpu_custom_call.1} parent=1 // pred_region
      %98 = dma.done [#allocation9], 2048
    $region45: #{tpu_custom_call.1} parent=1 // pred_fallthru
      _
    // Predicated region
    $region46: #{tpu_custom_call.1} parent=1 // pred_check
      _
    $region47: #{tpu_custom_call.1} parent=1 // pred_check_branch
      %100 = sbr.rel (0) target = $region49
    $region48: #{tpu_custom_call.1} parent=1 // pred_region
      %101 = dma.done [#allocation9], 2048
    $region49: #{tpu_custom_call.1} parent=1 // pred_fallthru
      _
    // Predicated region
    $region50: #{tpu_custom_call.1} parent=1 // pred_check
      _
    $region51: #{tpu_custom_call.1} parent=1 // pred_check_branch
      %103 = sbr.rel (0) target = $region53
    $region52: #{tpu_custom_call.1} parent=1 // pred_region
      %104 = dma.done [#allocation12], 128
    $region53: #{tpu_custom_call.1} parent=1 // pred_fallthru
      _
    %v105 = vld [vmem:[#allocation2] sm:$0xff]
    %v106 = vld [vmem:[#allocation2 + $0x8] sm:$0xff]
    %v107 = vld [vmem:[#allocation2 + $0x10] sm:$0xff]
    %v108 = vld [vmem:[#allocation2 + $0x18] sm:$0xff]
    %v109 = vld [vmem:[#allocation11] sm:$0xff]
    %v110 = vld [vmem:[#allocation5] sm:$0xff]
    %v111 = vld [vmem:[#allocation5 + $0x8] sm:$0xff]
    %v112 = vld [vmem:[#allocation8] sm:$0xff]
    %v113 = vld [vmem:[#allocation8 + $0x8] sm:$0xff]
    %v114 = vld [vmem:[#allocation8 + $0x10] sm:$0xff]
    %v115 = vld [vmem:[#allocation8 + $0x18] sm:$0xff]
    %v116 = vld [vmem:[#allocation8 + $0x20] sm:$0xff]
    %v117 = vld [vmem:[#allocation8 + $0x28] sm:$0xff]
    %v118 = vld [vmem:[#allocation8 + $0x30] sm:$0xff]
    %v119 = vld [vmem:[#allocation8 + $0x38] sm:$0xff]
    %v120 = vld [vmem:[#allocation8 + $0x40] sm:$0xff]
    %v121 = vld [vmem:[#allocation8 + $0x48] sm:$0xff]
    %v122 = vld [vmem:[#allocation8 + $0x50] sm:$0xff]
    %v123 = vld [vmem:[#allocation8 + $0x58] sm:$0xff]
    %v124 = vld [vmem:[#allocation8 + $0x60] sm:$0xff]
    %v125 = vld [vmem:[#allocation8 + $0x68] sm:$0xff]
    %v126 = vld [vmem:[#allocation8 + $0x70] sm:$0xff]
    %v127 = vld [vmem:[#allocation8 + $0x78] sm:$0xff]
    %v128 = vcombine.low 0.0, 0.0
    %v130 = vunpack.c.l.s4 1983009808
    %v131 = vunpack.c.0.s8 %v130
    %v132 = vlaneseq
    %v133 = vshrl.u32 %v132, 7
    %v134 = vsub.s32 %v131, %v133
    %v135 = vrot.slane %v128, %v134
    %v136 = vcombine.low %v135, %v135
    %v138 = vunpack.c.l.s4 1934713408
    %v139 = vunpack.c.0.s8 %v138
    %v140 = vlaneseq
    %v141 = vshrl.u32 %v140, 7
    %v142 = vsub.s32 %v139, %v141
    %v143 = vrot.slane %v136, %v142
    %v144 = vcombine.low %v143, %v143
    %v145 = vcombine.high %v143, %v143
    %147 = vrot.lane.b32.xlu0 %v145, 16
    %v148 = vpop.permute.xlu0 %147
    %vm150 = vcmask 130048
    %v151 = vsel %vm150, %v144, %v148
    %152 = vmatprep.subr.mxu0 0.0
    %153 = vmatpush1.xpose.msra.mxu0 %v105
    %154 = vmatprep.subr.mxu0 0.0
    %155 = vmatpush1.xpose.msra.mxu0 %v106
    %156 = vmatprep.subr.mxu0 0.0
    %157 = vmatpush1.xpose.msra.mxu0 %v107
    %158 = vmatprep.subr.mxu0 0.0
    %159 = vmatpush1.xpose.msra.mxu0 %v108
    %160 = vmatprep.subr.mxu0 0.0
    %161 = vmatpush1.xpose.msra.mxu0 0.0
    %162 = vmatprep.subr.mxu0 0.0
    %163 = vmatpush1.xpose.msra.mxu0 0.0
    %164 = vmatprep.subr.mxu0 0.0
    %165 = vmatpush1.xpose.msra.mxu0 0.0
    %166 = vmatprep.subr.mxu0 0.0
    %167 = vmatpush1.xpose.msra.mxu0 0.0
    %168 = vmatprep.subr.mxu0 0.0
    %169 = vmatpush1.xpose.msra.mxu0 0.0
    %170 = vmatprep.subr.mxu0 0.0
    %171 = vmatpush1.xpose.msra.mxu0 0.0
    %172 = vmatprep.subr.mxu0 0.0
    %173 = vmatpush1.xpose.msra.mxu0 0.0
    %174 = vmatprep.subr.mxu0 0.0
    %175 = vmatpush1.xpose.msra.mxu0 0.0
    %176 = vmatprep.subr.mxu0 0.0
    %177 = vmatpush1.xpose.msra.mxu0 0.0
    %178 = vmatprep.subr.mxu0 0.0
    %179 = vmatpush1.xpose.msra.mxu0 0.0
    %180 = vmatprep.subr.mxu0 0.0
    %181 = vmatpush1.xpose.msra.mxu0 0.0
    %182 = vmatprep.subr.mxu0 0.0
    %183 = vmatpush1.xpose.msra.mxu0 0.0
    %184 = vmatprep.subr.mxu0 0.0
    %185 = vmatpush1.xpose.msra.mxu0 0.0
    %186 = vmatprep.subr.mxu0 0.0
    %187 = vmatpush1.xpose.msra.mxu0 0.0
    %188 = vmatprep.subr.mxu0 0.0
    %189 = vmatpush1.xpose.msra.mxu0 0.0
    %190 = vmatprep.subr.mxu0 0.0
    %191 = vmatpush1.xpose.msra.mxu0 0.0
    %192 = vmatprep.subr.mxu0 0.0
    %193 = vmatpush1.xpose.msra.mxu0 0.0
    %194 = vmatprep.subr.mxu0 0.0
    %195 = vmatpush1.xpose.msra.mxu0 0.0
    %196 = vmatprep.subr.mxu0 0.0
    %197 = vmatpush1.xpose.msra.mxu0 0.0
    %198 = vmatprep.subr.mxu0 0.0
    %199 = vmatpush1.xpose.msra.mxu0 0.0
    %200 = vmatprep.subr.mxu0 0.0
    %201 = vmatpush1.xpose.msra.mxu0 0.0
    %202 = vmatprep.subr.mxu0 0.0
    %203 = vmatpush1.xpose.msra.mxu0 0.0
    %204 = vmatprep.subr.mxu0 0.0
    %205 = vmatpush1.xpose.msra.mxu0 0.0
    %206 = vmatprep.subr.mxu0 0.0
    %207 = vmatpush1.xpose.msra.mxu0 0.0
    %208 = vmatprep.subr.mxu0 0.0
    %209 = vmatpush1.xpose.msra.mxu0 0.0
    %210 = vmatprep.subr.mxu0 0.0
    %211 = vmatpush1.xpose.msra.mxu0 0.0
    %212 = vmatprep.subr.mxu0 0.0
    %213 = vmatpush1.xpose.msra.mxu0 0.0
    %214 = vmatprep.subr.mxu0 0.0
    %215 = vmatpush1.xpose.msra.mxu0 0.0
    %216 = vmatprep.mubr.f32.mxu0 0.0
    %217 = vmatmul.mubr.f32.gmra.mrb[0].mxu0 %v110
    %v218 = vpop.f32.mrb[0].mxu0
    %v219 = vadd.f32 %v151, %v218
    %v220 = vpop.f32.mrb[0].mxu0
    %221 = vmatprep.mubr.f32.mxu0 0.0
    %222 = vmatmul.mubr.f32.gmra.mrb[0].mxu0 %v111
    %v223 = vpop.f32.mrb[0].mxu0
    %v224 = vadd.f32 %v151, %v223
    %v225 = vpop.f32.mrb[0].mxu0
    %226 = vdwg.mxu0
    %229 = vrot.lane.b32.xlu0 %v219, 112
    %v230 = vpop.permute.xlu0 %229
    %231 = vrot.lane.b32.xlu0 %v224, 112
    %v232 = vpop.permute.xlu0 %231
    %v235 = vcombine.high %v219, 0.0
    %v237 = vunpack.c.l.s4 1983009808
    %v238 = vunpack.c.0.s8 %v237
    %v239 = vlaneseq
    %v240 = vshrl.u32 %v239, 7
    %v241 = vsub.s32 %v238, %v240
    %v242 = vrot.slane %v219, %v241
    %v244 = vunpack.c.l.s4 1983009808
    %v245 = vunpack.c.0.s8 %v244
    %v246 = vlaneseq
    %v247 = vshrl.u32 %v246, 7
    %v248 = vsub.s32 %v245, %v247
    %v249 = vrot.slane %v235, %v248
    %v250 = vcombine.high %v230, 0.0
    %v252 = vunpack.c.l.s4 1983009808
    %v253 = vunpack.c.0.s8 %v252
    %v254 = vlaneseq
    %v255 = vshrl.u32 %v254, 7
    %v256 = vsub.s32 %v253, %v255
    %v257 = vrot.slane %v230, %v256
    %v259 = vunpack.c.l.s4 1983009808
    %v260 = vunpack.c.0.s8 %v259
    %v261 = vlaneseq
    %v262 = vshrl.u32 %v261, 7
    %v263 = vsub.s32 %v260, %v262
    %v264 = vrot.slane %v250, %v263
    %v265 = vcombine.low %v242, %v257
    %v266 = vcombine.high %v242, %v257
    %v268 = vunpack.c.l.s4 1934713408
    %v269 = vunpack.c.0.s8 %v268
    %v270 = vlaneseq
    %v271 = vshrl.u32 %v270, 7
    %v272 = vsub.s32 %v269, %v271
    %v273 = vrot.slane %v265, %v272
    %v275 = vunpack.c.l.s4 1934713408
    %v276 = vunpack.c.0.s8 %v275
    %v277 = vlaneseq
    %v278 = vshrl.u32 %v277, 7
    %v279 = vsub.s32 %v276, %v278
    %v280 = vrot.slane %v266, %v279
    %v281 = vcombine.low %v249, %v264
    %v282 = vcombine.high %v249, %v264
    %v284 = vunpack.c.l.s4 1934713408
    %v285 = vunpack.c.0.s8 %v284
    %v286 = vlaneseq
    %v287 = vshrl.u32 %v286, 7
    %v288 = vsub.s32 %v285, %v287
    %v289 = vrot.slane %v281, %v288
    %v291 = vunpack.c.l.s4 1934713408
    %v292 = vunpack.c.0.s8 %v291
    %v293 = vlaneseq
    %v294 = vshrl.u32 %v293, 7
    %v295 = vsub.s32 %v292, %v294
    %v296 = vrot.slane %v282, %v295
    %v297 = vcombine.high %v273, 0.0
    %v298 = vcombine.high %v280, 0.0
    %v299 = vcombine.high %v289, 0.0
    %v300 = vcombine.high %v296, 0.0
    %v301 = vcombine.high %v224, 0.0
    %v303 = vunpack.c.l.s4 1983009808
    %v304 = vunpack.c.0.s8 %v303
    %v305 = vlaneseq
    %v306 = vshrl.u32 %v305, 7
    %v307 = vsub.s32 %v304, %v306
    %v308 = vrot.slane %v224, %v307
    %v310 = vunpack.c.l.s4 1983009808
    %v311 = vunpack.c.0.s8 %v310
    %v312 = vlaneseq
    %v313 = vshrl.u32 %v312, 7
    %v314 = vsub.s32 %v311, %v313
    %v315 = vrot.slane %v301, %v314
    %v316 = vcombine.high %v232, 0.0
    %v318 = vunpack.c.l.s4 1983009808
    %v319 = vunpack.c.0.s8 %v318
    %v320 = vlaneseq
    %v321 = vshrl.u32 %v320, 7
    %v322 = vsub.s32 %v319, %v321
    %v323 = vrot.slane %v232, %v322
    %v325 = vunpack.c.l.s4 1983009808
    %v326 = vunpack.c.0.s8 %v325
    %v327 = vlaneseq
    %v328 = vshrl.u32 %v327, 7
    %v329 = vsub.s32 %v326, %v328
    %v330 = vrot.slane %v316, %v329
    %v331 = vcombine.low %v308, %v323
    %v332 = vcombine.high %v308, %v323
    %v334 = vunpack.c.l.s4 1934713408
    %v335 = vunpack.c.0.s8 %v334
    %v336 = vlaneseq
    %v337 = vshrl.u32 %v336, 7
    %v338 = vsub.s32 %v335, %v337
    %v339 = vrot.slane %v331, %v338
    %v341 = vunpack.c.l.s4 1934713408
    %v342 = vunpack.c.0.s8 %v341
    %v343 = vlaneseq
    %v344 = vshrl.u32 %v343, 7
    %v345 = vsub.s32 %v342, %v344
    %v346 = vrot.slane %v332, %v345
    %v347 = vcombine.low %v315, %v330
    %v348 = vcombine.high %v315, %v330
    %v350 = vunpack.c.l.s4 1934713408
    %v351 = vunpack.c.0.s8 %v350
    %v352 = vlaneseq
    %v353 = vshrl.u32 %v352, 7
    %v354 = vsub.s32 %v351, %v353
    %v355 = vrot.slane %v347, %v354
    %v357 = vunpack.c.l.s4 1934713408
    %v358 = vunpack.c.0.s8 %v357
    %v359 = vlaneseq
    %v360 = vshrl.u32 %v359, 7
    %v361 = vsub.s32 %v358, %v360
    %v362 = vrot.slane %v348, %v361
    %v363 = vcombine.high %v339, 0.0
    %v364 = vcombine.high %v346, 0.0
    %v365 = vcombine.high %v355, 0.0
    %v366 = vcombine.high %v362, 0.0
    %v367 = vcombine.low %v273, %v280
    %v369 = vunpack.c.l.s4 1983009808
    %v370 = vunpack.c.0.s8 %v369
    %v371 = vlaneseq
    %v372 = vshrl.u32 %v371, 7
    %v373 = vsub.s32 %v370, %v372
    %v374 = vrot.slane %v367, %v373
    %v375 = vcombine.low %v297, %v298
    %v377 = vunpack.c.l.s4 1983009808
    %v378 = vunpack.c.0.s8 %v377
    %v379 = vlaneseq
    %v380 = vshrl.u32 %v379, 7
    %v381 = vsub.s32 %v378, %v380
    %v382 = vrot.slane %v375, %v381
    %v383 = vcombine.low %v289, %v296
    %v385 = vunpack.c.l.s4 1983009808
    %v386 = vunpack.c.0.s8 %v385
    %v387 = vlaneseq
    %v388 = vshrl.u32 %v387, 7
    %v389 = vsub.s32 %v386, %v388
    %v390 = vrot.slane %v383, %v389
    %v391 = vcombine.low %v299, %v300
    %v393 = vunpack.c.l.s4 1983009808
    %v394 = vunpack.c.0.s8 %v393
    %v395 = vlaneseq
    %v396 = vshrl.u32 %v395, 7
    %v397 = vsub.s32 %v394, %v396
    %v398 = vrot.slane %v391, %v397
    %v399 = vcombine.low %v374, %v382
    %v401 = vunpack.c.l.s4 1934713408
    %v402 = vunpack.c.0.s8 %v401
    %v403 = vlaneseq
    %v404 = vshrl.u32 %v403, 7
    %v405 = vsub.s32 %v402, %v404
    %v406 = vrot.slane %v399, %v405
    %v407 = vcombine.low %v390, %v398
    %v409 = vunpack.c.l.s4 1934713408
    %v410 = vunpack.c.0.s8 %v409
    %v411 = vlaneseq
    %v412 = vshrl.u32 %v411, 7
    %v413 = vsub.s32 %v410, %v412
    %v414 = vrot.slane %v407, %v413
    %v415 = vcombine.low %v406, %v414
    %v416 = vcombine.high %v406, %v414
    %v417 = vcombine.low %v339, %v346
    %v419 = vunpack.c.l.s4 1983009808
    %v420 = vunpack.c.0.s8 %v419
    %v421 = vlaneseq
    %v422 = vshrl.u32 %v421, 7
    %v423 = vsub.s32 %v420, %v422
    %v424 = vrot.slane %v417, %v423
    %v425 = vcombine.low %v363, %v364
    %v427 = vunpack.c.l.s4 1983009808
    %v428 = vunpack.c.0.s8 %v427
    %v429 = vlaneseq
    %v430 = vshrl.u32 %v429, 7
    %v431 = vsub.s32 %v428, %v430
    %v432 = vrot.slane %v425, %v431
    %v433 = vcombine.low %v355, %v362
    %v435 = vunpack.c.l.s4 1983009808
    %v436 = vunpack.c.0.s8 %v435
    %v437 = vlaneseq
    %v438 = vshrl.u32 %v437, 7
    %v439 = vsub.s32 %v436, %v438
    %v440 = vrot.slane %v433, %v439
    %v441 = vcombine.low %v365, %v366
    %v443 = vunpack.c.l.s4 1983009808
    %v444 = vunpack.c.0.s8 %v443
    %v445 = vlaneseq
    %v446 = vshrl.u32 %v445, 7
    %v447 = vsub.s32 %v444, %v446
    %v448 = vrot.slane %v441, %v447
    %v449 = vcombine.low %v424, %v432
    %v451 = vunpack.c.l.s4 1934713408
    %v452 = vunpack.c.0.s8 %v451
    %v453 = vlaneseq
    %v454 = vshrl.u32 %v453, 7
    %v455 = vsub.s32 %v452, %v454
    %v456 = vrot.slane %v449, %v455
    %v457 = vcombine.low %v440, %v448
    %v459 = vunpack.c.l.s4 1934713408
    %v460 = vunpack.c.0.s8 %v459
    %v461 = vlaneseq
    %v462 = vshrl.u32 %v461, 7
    %v463 = vsub.s32 %v460, %v462
    %v464 = vrot.slane %v457, %v463
    %v465 = vcombine.low %v456, %v464
    %v466 = vcombine.high %v456, %v464
    %v467 = vsel %vm150, %v415, -inf
    %468 = vmax.xlane.f32.xlu0 %v467
    %v469 = vpop.xlane.xlu0 %468
    %v470 = vsel %vm150, %v465, -inf
    %471 = vmax.xlane.f32.xlu0 %v470
    %v472 = vpop.xlane.xlu0 %471
    %v473 = vsel %vm150, %v416, -inf
    %474 = vmax.xlane.f32.xlu0 %v473
    %v475 = vpop.xlane.xlu0 %474
    %v476 = vsel %vm150, %v466, -inf
    %477 = vmax.xlane.f32.xlu0 %v476
    %v478 = vpop.xlane.xlu0 %477
    %v479 = vsub.f32 %v415, %v469
    %v480 = vsub.f32 %v465, %v472
    %v481 = vsub.f32 %v416, %v475
    %v482 = vsub.f32 %v466, %v478
    %v483 = vmul.f32 %v479, 1.442695
    %v484 = vpow.pop %v483
    %v485 = vmul.f32 %v480, 1.442695
    %v486 = vpow.pop %v485
    %v487 = vmul.f32 %v481, 1.442695
    %v488 = vpow.pop %v487
    %v489 = vmul.f32 %v482, 1.442695
    %v490 = vpow.pop %v489
    %v491 = vsel %vm150, %v484, 0.0
    %492 = vadd.xlane.f32.xlu0 %v491
    %v493 = vpop.xlane.xlu0 %492
    %v494 = vsel %vm150, %v486, 0.0
    %495 = vadd.xlane.f32.xlu0 %v494
    %v496 = vpop.xlane.xlu0 %495
    %v497 = vsel %vm150, %v488, 0.0
    %498 = vadd.xlane.f32.xlu0 %v497
    %v499 = vpop.xlane.xlu0 %498
    %v500 = vsel %vm150, %v490, 0.0
    %501 = vadd.xlane.f32.xlu0 %v500
    %v502 = vpop.xlane.xlu0 %501
    %v503 = vrcp.pop %v493
    %v504 = vmul.f32 %v484, %v503
    %v505 = vrcp.pop %v496
    %v506 = vmul.f32 %v486, %v505
    %v507 = vrcp.pop %v499
    %v508 = vmul.f32 %v488, %v507
    %v509 = vrcp.pop %v502
    %v510 = vmul.f32 %v490, %v509
    %v512 = vsel %vm150, %v504, 0
    %v515 = vsel %vm150, %v506, 0
    %517 = vmatprep.subr.mxu0 0.0
    %518 = vmatpush1.msra.mxu0 %v105
    %519 = vmatprep.subr.mxu0 0.0
    %520 = vmatpush1.msra.mxu0 %v106
    %521 = vmatprep.subr.mxu0 0.0
    %522 = vmatpush1.msra.mxu0 0.0
    %523 = vmatprep.subr.mxu0 0.0
    %524 = vmatpush1.msra.mxu0 0.0
    %525 = vmatprep.subr.mxu0 0.0
    %526 = vmatpush1.msra.mxu0 0.0
    %527 = vmatprep.subr.mxu0 0.0
    %528 = vmatpush1.msra.mxu0 0.0
    %529 = vmatprep.subr.mxu0 0.0
    %530 = vmatpush1.msra.mxu0 0.0
    %531 = vmatprep.subr.mxu0 0.0
    %532 = vmatpush1.msra.mxu0 0.0
    %533 = vmatprep.subr.mxu0 0.0
    %534 = vmatpush1.msra.mxu0 0.0
    %535 = vmatprep.subr.mxu0 0.0
    %536 = vmatpush1.msra.mxu0 0.0
    %537 = vmatprep.subr.mxu0 0.0
    %538 = vmatpush1.msra.mxu0 0.0
    %539 = vmatprep.subr.mxu0 0.0
    %540 = vmatpush1.msra.mxu0 0.0
    %541 = vmatprep.subr.mxu0 0.0
    %542 = vmatpush1.msra.mxu0 0.0
    %543 = vmatprep.subr.mxu0 0.0
    %544 = vmatpush1.msra.mxu0 0.0
    %545 = vmatprep.subr.mxu0 0.0
    %546 = vmatpush1.msra.mxu0 0.0
    %547 = vmatprep.subr.mxu0 0.0
    %548 = vmatpush1.msra.mxu0 0.0
    %549 = vmatprep.subr.mxu0 0.0
    %550 = vmatpush1.msra.mxu0 0.0
    %551 = vmatprep.subr.mxu0 0.0
    %552 = vmatpush1.msra.mxu0 0.0
    %553 = vmatprep.subr.mxu0 0.0
    %554 = vmatpush1.msra.mxu0 0.0
    %555 = vmatprep.subr.mxu0 0.0
    %556 = vmatpush1.msra.mxu0 0.0
    %557 = vmatprep.subr.mxu0 0.0
    %558 = vmatpush1.msra.mxu0 0.0
    %559 = vmatprep.subr.mxu0 0.0
    %560 = vmatpush1.msra.mxu0 0.0
    %561 = vmatprep.subr.mxu0 0.0
    %562 = vmatpush1.msra.mxu0 0.0
    %563 = vmatprep.subr.mxu0 0.0
    %564 = vmatpush1.msra.mxu0 0.0
    %565 = vmatprep.subr.mxu0 0.0
    %566 = vmatpush1.msra.mxu0 0.0
    %567 = vmatprep.subr.mxu0 0.0
    %568 = vmatpush1.msra.mxu0 0.0
    %569 = vmatprep.subr.mxu0 0.0
    %570 = vmatpush1.msra.mxu0 0.0
    %571 = vmatprep.subr.mxu0 0.0
    %572 = vmatpush1.msra.mxu0 0.0
    %573 = vmatprep.subr.mxu0 0.0
    %574 = vmatpush1.msra.mxu0 0.0
    %575 = vmatprep.subr.mxu0 0.0
    %576 = vmatpush1.msra.mxu0 0.0
    %577 = vmatprep.subr.mxu0 0.0
    %578 = vmatpush1.msra.mxu0 0.0
    %579 = vmatprep.subr.mxu0 0.0
    %580 = vmatpush1.msra.mxu0 0.0
    %581 = vmatprep.mubr.f32.mxu0 0.0
    %582 = vmatmul.mubr.f32.gmra.mrb[0].mxu0 %v512
    %v583 = vpop.f32.mrb[0].mxu0
    %v584 = vadd.f32 0.0, %v583
    %v585 = vpop.f32.mrb[0].mxu0
    %586 = vmatprep.mubr.f32.mxu0 0.0
    %587 = vmatmul.mubr.f32.gmra.mrb[0].mxu0 %v515
    %v588 = vpop.f32.mrb[0].mxu0
    %v589 = vadd.f32 0.0, %v588
    %v590 = vpop.f32.mrb[0].mxu0
    %591 = vdwg.mxu0
    %v593 = vsel %vm150, %v508, 0
    %v596 = vsel %vm150, %v510, 0
    %598 = vmatprep.subr.mxu0 0.0
    %599 = vmatpush1.msra.mxu0 %v107
    %600 = vmatprep.subr.mxu0 0.0
    %601 = vmatpush1.msra.mxu0 %v108
    %602 = vmatprep.subr.mxu0 0.0
    %603 = vmatpush1.msra.mxu0 0.0
    %604 = vmatprep.subr.mxu0 0.0
    %605 = vmatpush1.msra.mxu0 0.0
    %606 = vmatprep.subr.mxu0 0.0
    %607 = vmatpush1.msra.mxu0 0.0
    %608 = vmatprep.subr.mxu0 0.0
    %609 = vmatpush1.msra.mxu0 0.0
    %610 = vmatprep.subr.mxu0 0.0
    %611 = vmatpush1.msra.mxu0 0.0
    %612 = vmatprep.subr.mxu0 0.0
    %613 = vmatpush1.msra.mxu0 0.0
    %614 = vmatprep.subr.mxu0 0.0
    %615 = vmatpush1.msra.mxu0 0.0
    %616 = vmatprep.subr.mxu0 0.0
    %617 = vmatpush1.msra.mxu0 0.0
    %618 = vmatprep.subr.mxu0 0.0
    %619 = vmatpush1.msra.mxu0 0.0
    %620 = vmatprep.subr.mxu0 0.0
    %621 = vmatpush1.msra.mxu0 0.0
    %622 = vmatprep.subr.mxu0 0.0
    %623 = vmatpush1.msra.mxu0 0.0
    %624 = vmatprep.subr.mxu0 0.0
    %625 = vmatpush1.msra.mxu0 0.0
    %626 = vmatprep.subr.mxu0 0.0
    %627 = vmatpush1.msra.mxu0 0.0
    %628 = vmatprep.subr.mxu0 0.0
    %629 = vmatpush1.msra.mxu0 0.0
    %630 = vmatprep.subr.mxu0 0.0
    %631 = vmatpush1.msra.mxu0 0.0
    %632 = vmatprep.subr.mxu0 0.0
    %633 = vmatpush1.msra.mxu0 0.0
    %634 = vmatprep.subr.mxu0 0.0
    %635 = vmatpush1.msra.mxu0 0.0
    %636 = vmatprep.subr.mxu0 0.0
    %637 = vmatpush1.msra.mxu0 0.0
    %638 = vmatprep.subr.mxu0 0.0
    %639 = vmatpush1.msra.mxu0 0.0
    %640 = vmatprep.subr.mxu0 0.0
    %641 = vmatpush1.msra.mxu0 0.0
    %642 = vmatprep.subr.mxu0 0.0
    %643 = vmatpush1.msra.mxu0 0.0
    %644 = vmatprep.subr.mxu0 0.0
    %645 = vmatpush1.msra.mxu0 0.0
    %646 = vmatprep.subr.mxu0 0.0
    %647 = vmatpush1.msra.mxu0 0.0
    %648 = vmatprep.subr.mxu0 0.0
    %649 = vmatpush1.msra.mxu0 0.0
    %650 = vmatprep.subr.mxu0 0.0
    %651 = vmatpush1.msra.mxu0 0.0
    %652 = vmatprep.subr.mxu0 0.0
    %653 = vmatpush1.msra.mxu0 0.0
    %654 = vmatprep.subr.mxu0 0.0
    %655 = vmatpush1.msra.mxu0 0.0
    %656 = vmatprep.subr.mxu0 0.0
    %657 = vmatpush1.msra.mxu0 0.0
    %658 = vmatprep.subr.mxu0 0.0
    %659 = vmatpush1.msra.mxu0 0.0
    %660 = vmatprep.subr.mxu0 0.0
    %661 = vmatpush1.msra.mxu0 0.0
    %662 = vmatprep.mubr.f32.mxu0 0.0
    %663 = vmatmul.mubr.f32.gmra.mrb[0].mxu0 %v593
    %v664 = vpop.f32.mrb[0].mxu0
    %v665 = vadd.f32 0.0, %v664
    %v666 = vpop.f32.mrb[0].mxu0
    %667 = vmatprep.mubr.f32.mxu0 0.0
    %668 = vmatmul.mubr.f32.gmra.mrb[0].mxu0 %v596
    %v669 = vpop.f32.mrb[0].mxu0
    %v670 = vadd.f32 0.0, %v669
    %v671 = vpop.f32.mrb[0].mxu0
    %672 = vdwg.mxu0
    %v673 = vlaneseq
    %v674 = vshrl.u32 %v673, 7
    %v675 = vsub.s32 0, %v674
    %v676 = vrot.slane %v109, %v675
    %677 = vmatprep.subr.mxu0 0.0
    %678 = vmatpush1.xpose.msra.mxu0 %v112
    %679 = vmatprep.subr.mxu0 0.0
    %680 = vmatpush1.xpose.msra.mxu0 %v113
    %681 = vmatprep.subr.mxu0 0.0
    %682 = vmatpush1.xpose.msra.mxu0 %v114
    %683 = vmatprep.subr.mxu0 0.0
    %684 = vmatpush1.xpose.msra.mxu0 %v115
    %685 = vmatprep.subr.mxu0 0.0
    %686 = vmatpush1.xpose.msra.mxu0 %v116
    %687 = vmatprep.subr.mxu0 0.0
    %688 = vmatpush1.xpose.msra.mxu0 %v117
    %689 = vmatprep.subr.mxu0 0.0
    %690 = vmatpush1.xpose.msra.mxu0 %v118
    %691 = vmatprep.subr.mxu0 0.0
    %692 = vmatpush1.xpose.msra.mxu0 %v119
    %693 = vmatprep.subr.mxu0 0.0
    %694 = vmatpush1.xpose.msra.mxu0 %v120
    %695 = vmatprep.subr.mxu0 0.0
    %696 = vmatpush1.xpose.msra.mxu0 %v121
    %697 = vmatprep.subr.mxu0 0.0
    %698 = vmatpush1.xpose.msra.mxu0 %v122
    %699 = vmatprep.subr.mxu0 0.0
    %700 = vmatpush1.xpose.msra.mxu0 %v123
    %701 = vmatprep.subr.mxu0 0.0
    %702 = vmatpush1.xpose.msra.mxu0 %v124
    %703 = vmatprep.subr.mxu0 0.0
    %704 = vmatpush1.xpose.msra.mxu0 %v125
    %705 = vmatprep.subr.mxu0 0.0
    %706 = vmatpush1.xpose.msra.mxu0 %v126
    %707 = vmatprep.subr.mxu0 0.0
    %708 = vmatpush1.xpose.msra.mxu0 %v127
    %709 = vmatprep.subr.mxu0 0.0
    %710 = vmatpush1.xpose.msra.mxu0 0.0
    %711 = vmatprep.subr.mxu0 0.0
    %712 = vmatpush1.xpose.msra.mxu0 0.0
    %713 = vmatprep.subr.mxu0 0.0
    %714 = vmatpush1.xpose.msra.mxu0 0.0
    %715 = vmatprep.subr.mxu0 0.0
    %716 = vmatpush1.xpose.msra.mxu0 0.0
    %717 = vmatprep.subr.mxu0 0.0
    %718 = vmatpush1.xpose.msra.mxu0 0.0
    %719 = vmatprep.subr.mxu0 0.0
    %720 = vmatpush1.xpose.msra.mxu0 0.0
    %721 = vmatprep.subr.mxu0 0.0
    %722 = vmatpush1.xpose.msra.mxu0 0.0
    %723 = vmatprep.subr.mxu0 0.0
    %724 = vmatpush1.xpose.msra.mxu0 0.0
    %725 = vmatprep.subr.mxu0 0.0
    %726 = vmatpush1.xpose.msra.mxu0 0.0
    %727 = vmatprep.subr.mxu0 0.0
    %728 = vmatpush1.xpose.msra.mxu0 0.0
    %729 = vmatprep.subr.mxu0 0.0
    %730 = vmatpush1.xpose.msra.mxu0 0.0
    %731 = vmatprep.subr.mxu0 0.0
    %732 = vmatpush1.xpose.msra.mxu0 0.0
    %733 = vmatprep.subr.mxu0 0.0
    %734 = vmatpush1.xpose.msra.mxu0 0.0
    %735 = vmatprep.subr.mxu0 0.0
    %736 = vmatpush1.xpose.msra.mxu0 0.0
    %737 = vmatprep.subr.mxu0 0.0
    %738 = vmatpush1.xpose.msra.mxu0 0.0
    %739 = vmatprep.subr.mxu0 0.0
    %740 = vmatpush1.xpose.msra.mxu0 0.0
    %741 = vmatprep.mubr.f32.mxu0 0.0
    %742 = vmatmul.mubr.f32.gmra.mrb[0].mxu0 %v584
    %v743 = vpop.f32.mrb[0].mxu0
    %v744 = vadd.f32 %v676, %v743
    %v745 = vpop.f32.mrb[0].mxu0
    %746 = vmatprep.mubr.f32.mxu0 0.0
    %747 = vmatmul.mubr.f32.gmra.mrb[0].mxu0 %v589
    %v748 = vpop.f32.mrb[0].mxu0
    %v749 = vadd.f32 %v676, %v748
    %v750 = vpop.f32.mrb[0].mxu0
    %751 = vmatprep.mubr.f32.mxu0 0.0
    %752 = vmatmul.mubr.f32.gmra.mrb[0].mxu0 %v665
    %v753 = vpop.f32.mrb[0].mxu0
    %v754 = vadd.f32 %v676, %v753
    %v755 = vpop.f32.mrb[0].mxu0
    %756 = vmatprep.mubr.f32.mxu0 0.0
    %757 = vmatmul.mubr.f32.gmra.mrb[0].mxu0 %v670
    %v758 = vpop.f32.mrb[0].mxu0
    %v759 = vadd.f32 %v676, %v758
    %v760 = vpop.f32.mrb[0].mxu0
    %761 = vdwg.mxu0
    %v762 = vadd.f32 %v744, %v749
    %v763 = vadd.f32 %v762, %v754
    %v764 = vadd.f32 %v763, %v759
    %v765 = vrot.slane %v764, 4
    %v766 = vadd.f32 %v764, %v765
    %v767 = vrot.slane %v766, 2
    %v768 = vadd.f32 %v766, %v767
    %v769 = vrot.slane %v768, 1
    %v770 = vadd.f32 %v768, %v769
    %v771 = vmul.f32 %v770, 0.03125
    %v772 = vsub.f32 %v744, %v771
    %v773 = vsub.f32 %v749, %v771
    %v774 = vsub.f32 %v754, %v771
    %v775 = vsub.f32 %v759, %v771
    %v776 = vmul.f32 %v772, %v772
    %v777 = vmul.f32 %v773, %v773
    %v778 = vmul.f32 %v774, %v774
    %v779 = vmul.f32 %v775, %v775
    %v780 = vadd.f32 %v776, %v777
    %v781 = vadd.f32 %v780, %v778
    %v782 = vadd.f32 %v781, %v779
    %v783 = vrot.slane %v782, 4
    %v784 = vadd.f32 %v782, %v783
    %v785 = vrot.slane %v784, 2
    %v786 = vadd.f32 %v784, %v785
    %v787 = vrot.slane %v786, 1
    %v788 = vadd.f32 %v786, %v787
    %v789 = vmul.f32 %v788, 0.03125
    %v790 = vadd.f32 %v789, 1e-05
    %v791 = vrsqrt.pop %v790
    %v792 = vmul.f32 %v790, %v791
    %vm793 = vcmp.eq.f32.partialorder %v790, inf
    %v794 = vsel %vm793, %v790, %v792
    %vm795 = vcmp.eq.f32.partialorder %v790, 0.0
    %v796 = vand.u32 %v790, 2147483648
    %v797 = vsel %vm795, %v796, %v794
    %v798 = vrcp.pop %v797
    %v799 = vmul.f32 1.0, %v798
    %v800 = vmul.f32 %v799, %v109
    %v801 = vlaneseq
    %v802 = vshrl.u32 %v801, 7
    %v803 = vsub.s32 1, %v802
    %v804 = vrot.slane %v800, %v803
    %v805 = vmul.f32 %v772, %v804
    %v806 = vmul.f32 %v773, %v804
    %v807 = vmul.f32 %v774, %v804
    %v808 = vmul.f32 %v775, %v804
    %v809 = vlaneseq
    %v810 = vshrl.u32 %v809, 7
    %v811 = vsub.s32 2, %v810
    %v812 = vrot.slane %v109, %v811
    %v813 = vadd.f32 %v805, %v812
    %v814 = vadd.f32 %v806, %v812
    %v815 = vadd.f32 %v807, %v812
    %v816 = vadd.f32 %v808, %v812
    %v817 = vmax.f32 %v813, 0.0
    %v818 = vmax.f32 %v814, 0.0
    %v819 = vmax.f32 %v815, 0.0
    %v820 = vmax.f32 %v816, 0.0
    %v821 = vld [vmem:[#allocation7] sm:$0xff]
    %v822 = vld [vmem:[#allocation10] sm:$0xff]
    %v823 = vld [vmem:[#allocation10 + $0x8] sm:$0xff]
    %v824 = vld [vmem:[#allocation10 + $0x10] sm:$0xff]
    %v825 = vld [vmem:[#allocation10 + $0x18] sm:$0xff]
    %v826 = vld [vmem:[#allocation10 + $0x20] sm:$0xff]
    %v827 = vld [vmem:[#allocation10 + $0x28] sm:$0xff]
    %v828 = vld [vmem:[#allocation10 + $0x30] sm:$0xff]
    %v829 = vld [vmem:[#allocation10 + $0x38] sm:$0xff]
    %v830 = vld [vmem:[#allocation10 + $0x40] sm:$0xff]
    %v831 = vld [vmem:[#allocation10 + $0x48] sm:$0xff]
    %v832 = vld [vmem:[#allocation10 + $0x50] sm:$0xff]
    %v833 = vld [vmem:[#allocation10 + $0x58] sm:$0xff]
    %v834 = vld [vmem:[#allocation10 + $0x60] sm:$0xff]
    %v835 = vld [vmem:[#allocation10 + $0x68] sm:$0xff]
    %v836 = vld [vmem:[#allocation10 + $0x70] sm:$0xff]
    %v837 = vld [vmem:[#allocation10 + $0x78] sm:$0xff]
    %838 = vmatprep.subr.mxu0 0.0
    %839 = vmatpush1.xpose.msra.mxu0 %v817
    %840 = vmatprep.subr.mxu0 0.0
    %841 = vmatpush1.xpose.msra.mxu0 %v818
    %842 = vmatprep.subr.mxu0 0.0
    %843 = vmatpush1.xpose.msra.mxu0 %v819
    %844 = vmatprep.subr.mxu0 0.0
    %845 = vmatpush1.xpose.msra.mxu0 %v820
    %846 = vmatprep.subr.mxu0 0.0
    %847 = vmatpush1.xpose.msra.mxu0 0.0
    %848 = vmatprep.subr.mxu0 0.0
    %849 = vmatpush1.xpose.msra.mxu0 0.0
    %850 = vmatprep.subr.mxu0 0.0
    %851 = vmatpush1.xpose.msra.mxu0 0.0
    %852 = vmatprep.subr.mxu0 0.0
    %853 = vmatpush1.xpose.msra.mxu0 0.0
    %854 = vmatprep.subr.mxu0 0.0
    %855 = vmatpush1.xpose.msra.mxu0 0.0
    %856 = vmatprep.subr.mxu0 0.0
    %857 = vmatpush1.xpose.msra.mxu0 0.0
    %858 = vmatprep.subr.mxu0 0.0
    %859 = vmatpush1.xpose.msra.mxu0 0.0
    %860 = vmatprep.subr.mxu0 0.0
    %861 = vmatpush1.xpose.msra.mxu0 0.0
    %862 = vmatprep.subr.mxu0 0.0
    %863 = vmatpush1.xpose.msra.mxu0 0.0
    %864 = vmatprep.subr.mxu0 0.0
    %865 = vmatpush1.xpose.msra.mxu0 0.0
    %866 = vmatprep.subr.mxu0 0.0
    %867 = vmatpush1.xpose.msra.mxu0 0.0
    %868 = vmatprep.subr.mxu0 0.0
    %869 = vmatpush1.xpose.msra.mxu0 0.0
    %870 = vmatprep.subr.mxu0 0.0
    %871 = vmatpush1.xpose.msra.mxu0 0.0
    %872 = vmatprep.subr.mxu0 0.0
    %873 = vmatpush1.xpose.msra.mxu0 0.0
    %874 = vmatprep.subr.mxu0 0.0
    %875 = vmatpush1.xpose.msra.mxu0 0.0
    %876 = vmatprep.subr.mxu0 0.0
    %877 = vmatpush1.xpose.msra.mxu0 0.0
    %878 = vmatprep.subr.mxu0 0.0
    %879 = vmatpush1.xpose.msra.mxu0 0.0
    %880 = vmatprep.subr.mxu0 0.0
    %881 = vmatpush1.xpose.msra.mxu0 0.0
    %882 = vmatprep.subr.mxu0 0.0
    %883 = vmatpush1.xpose.msra.mxu0 0.0
    %884 = vmatprep.subr.mxu0 0.0
    %885 = vmatpush1.xpose.msra.mxu0 0.0
    %886 = vmatprep.subr.mxu0 0.0
    %887 = vmatpush1.xpose.msra.mxu0 0.0
    %888 = vmatprep.subr.mxu0 0.0
    %889 = vmatpush1.xpose.msra.mxu0 0.0
    %890 = vmatprep.subr.mxu0 0.0
    %891 = vmatpush1.xpose.msra.mxu0 0.0
    %892 = vmatprep.subr.mxu0 0.0
    %893 = vmatpush1.xpose.msra.mxu0 0.0
    %894 = vmatprep.subr.mxu0 0.0
    %895 = vmatpush1.xpose.msra.mxu0 0.0
    %896 = vmatprep.subr.mxu0 0.0
    %897 = vmatpush1.xpose.msra.mxu0 0.0
    %898 = vmatprep.subr.mxu0 0.0
    %899 = vmatpush1.xpose.msra.mxu0 0.0
    %900 = vmatprep.subr.mxu0 0.0
    %901 = vmatpush1.xpose.msra.mxu0 0.0
    %902 = vmatprep.mubr.f32.mxu0 0.0
    %903 = vmatmul.mubr.f32.gmra.mrb[0].mxu0 %v821
    %v904 = vpop.f32.mrb[0].mxu0
    %v905 = vadd.f32 %v151, %v904
    %v906 = vpop.f32.mrb[0].mxu0
    %907 = vdwg.mxu0
    %909 = vrot.lane.b32.xlu0 %v905, 112
    %v910 = vpop.permute.xlu0 %909
    %v912 = vcombine.high %v905, 0.0
    %v914 = vunpack.c.l.s4 1983009808
    %v915 = vunpack.c.0.s8 %v914
    %v916 = vlaneseq
    %v917 = vshrl.u32 %v916, 7
    %v918 = vsub.s32 %v915, %v917
    %v919 = vrot.slane %v905, %v918
    %v921 = vunpack.c.l.s4 1983009808
    %v922 = vunpack.c.0.s8 %v921
    %v923 = vlaneseq
    %v924 = vshrl.u32 %v923, 7
    %v925 = vsub.s32 %v922, %v924
    %v926 = vrot.slane %v912, %v925
    %v927 = vcombine.high %v910, 0.0
    %v929 = vunpack.c.l.s4 1983009808
    %v930 = vunpack.c.0.s8 %v929
    %v931 = vlaneseq
    %v932 = vshrl.u32 %v931, 7
    %v933 = vsub.s32 %v930, %v932
    %v934 = vrot.slane %v910, %v933
    %v936 = vunpack.c.l.s4 1983009808
    %v937 = vunpack.c.0.s8 %v936
    %v938 = vlaneseq
    %v939 = vshrl.u32 %v938, 7
    %v940 = vsub.s32 %v937, %v939
    %v941 = vrot.slane %v927, %v940
    %v942 = vcombine.low %v919, %v934
    %v943 = vcombine.high %v919, %v934
    %v945 = vunpack.c.l.s4 1934713408
    %v946 = vunpack.c.0.s8 %v945
    %v947 = vlaneseq
    %v948 = vshrl.u32 %v947, 7
    %v949 = vsub.s32 %v946, %v948
    %v950 = vrot.slane %v942, %v949
    %v952 = vunpack.c.l.s4 1934713408
    %v953 = vunpack.c.0.s8 %v952
    %v954 = vlaneseq
    %v955 = vshrl.u32 %v954, 7
    %v956 = vsub.s32 %v953, %v955
    %v957 = vrot.slane %v943, %v956
    %v958 = vcombine.low %v926, %v941
    %v959 = vcombine.high %v926, %v941
    %v961 = vunpack.c.l.s4 1934713408
    %v962 = vunpack.c.0.s8 %v961
    %v963 = vlaneseq
    %v964 = vshrl.u32 %v963, 7
    %v965 = vsub.s32 %v962, %v964
    %v966 = vrot.slane %v958, %v965
    %v968 = vunpack.c.l.s4 1934713408
    %v969 = vunpack.c.0.s8 %v968
    %v970 = vlaneseq
    %v971 = vshrl.u32 %v970, 7
    %v972 = vsub.s32 %v969, %v971
    %v973 = vrot.slane %v959, %v972
    %v974 = vcombine.high %v950, 0.0
    %v975 = vcombine.high %v957, 0.0
    %v976 = vcombine.high %v966, 0.0
    %v977 = vcombine.high %v973, 0.0
    %v978 = vcombine.low %v950, %v957
    %v980 = vunpack.c.l.s4 1983009808
    %v981 = vunpack.c.0.s8 %v980
    %v982 = vlaneseq
    %v983 = vshrl.u32 %v982, 7
    %v984 = vsub.s32 %v981, %v983
    %v985 = vrot.slane %v978, %v984
    %v986 = vcombine.low %v974, %v975
    %v988 = vunpack.c.l.s4 1983009808
    %v989 = vunpack.c.0.s8 %v988
    %v990 = vlaneseq
    %v991 = vshrl.u32 %v990, 7
    %v992 = vsub.s32 %v989, %v991
    %v993 = vrot.slane %v986, %v992
    %v994 = vcombine.low %v966, %v973
    %v996 = vunpack.c.l.s4 1983009808
    %v997 = vunpack.c.0.s8 %v996
    %v998 = vlaneseq
    %v999 = vshrl.u32 %v998, 7
    %v1000 = vsub.s32 %v997, %v999
    %v1001 = vrot.slane %v994, %v1000
    %v1002 = vcombine.low %v976, %v977
    %v1004 = vunpack.c.l.s4 1983009808
    %v1005 = vunpack.c.0.s8 %v1004
    %v1006 = vlaneseq
    %v1007 = vshrl.u32 %v1006, 7
    %v1008 = vsub.s32 %v1005, %v1007
    %v1009 = vrot.slane %v1002, %v1008
    %v1010 = vcombine.low %v985, %v993
    %v1012 = vunpack.c.l.s4 1934713408
    %v1013 = vunpack.c.0.s8 %v1012
    %v1014 = vlaneseq
    %v1015 = vshrl.u32 %v1014, 7
    %v1016 = vsub.s32 %v1013, %v1015
    %v1017 = vrot.slane %v1010, %v1016
    %v1018 = vcombine.low %v1001, %v1009
    %v1020 = vunpack.c.l.s4 1934713408
    %v1021 = vunpack.c.0.s8 %v1020
    %v1022 = vlaneseq
    %v1023 = vshrl.u32 %v1022, 7
    %v1024 = vsub.s32 %v1021, %v1023
    %v1025 = vrot.slane %v1018, %v1024
    %v1026 = vcombine.low %v1017, %v1025
    %v1027 = vcombine.high %v1017, %v1025
    %v1028 = vsel %vm150, %v1026, -inf
    %1029 = vmax.xlane.f32.xlu0 %v1028
    %v1030 = vpop.xlane.xlu0 %1029
    %v1031 = vsel %vm150, %v1027, -inf
    %1032 = vmax.xlane.f32.xlu0 %v1031
    %v1033 = vpop.xlane.xlu0 %1032
    %v1034 = vsub.f32 %v1026, %v1030
    %v1035 = vsub.f32 %v1027, %v1033
    %v1036 = vmul.f32 %v1034, 1.442695
    %v1037 = vpow.pop %v1036
    %v1038 = vmul.f32 %v1035, 1.442695
    %v1039 = vpow.pop %v1038
    %v1040 = vsel %vm150, %v1037, 0.0
    %1041 = vadd.xlane.f32.xlu0 %v1040
    %v1042 = vpop.xlane.xlu0 %1041
    %v1043 = vsel %vm150, %v1039, 0.0
    %1044 = vadd.xlane.f32.xlu0 %v1043
    %v1045 = vpop.xlane.xlu0 %1044
    %v1046 = vrcp.pop %v1042
    %v1047 = vmul.f32 %v1037, %v1046
    %v1048 = vrcp.pop %v1045
    %v1049 = vmul.f32 %v1039, %v1048
    %v1051 = vsel %vm150, %v1047, 0
    %1053 = vmatprep.subr.mxu0 0.0
    %1054 = vmatpush1.msra.mxu0 %v817
    %1055 = vmatprep.subr.mxu0 0.0
    %1056 = vmatpush1.msra.mxu0 %v818
    %1057 = vmatprep.subr.mxu0 0.0
    %1058 = vmatpush1.msra.mxu0 0.0
    %1059 = vmatprep.subr.mxu0 0.0
    %1060 = vmatpush1.msra.mxu0 0.0
    %1061 = vmatprep.subr.mxu0 0.0
    %1062 = vmatpush1.msra.mxu0 0.0
    %1063 = vmatprep.subr.mxu0 0.0
    %1064 = vmatpush1.msra.mxu0 0.0
    %1065 = vmatprep.subr.mxu0 0.0
    %1066 = vmatpush1.msra.mxu0 0.0
    %1067 = vmatprep.subr.mxu0 0.0
    %1068 = vmatpush1.msra.mxu0 0.0
    %1069 = vmatprep.subr.mxu0 0.0
    %1070 = vmatpush1.msra.mxu0 0.0
    %1071 = vmatprep.subr.mxu0 0.0
    %1072 = vmatpush1.msra.mxu0 0.0
    %1073 = vmatprep.subr.mxu0 0.0
    %1074 = vmatpush1.msra.mxu0 0.0
    %1075 = vmatprep.subr.mxu0 0.0
    %1076 = vmatpush1.msra.mxu0 0.0
    %1077 = vmatprep.subr.mxu0 0.0
    %1078 = vmatpush1.msra.mxu0 0.0
    %1079 = vmatprep.subr.mxu0 0.0
    %1080 = vmatpush1.msra.mxu0 0.0
    %1081 = vmatprep.subr.mxu0 0.0
    %1082 = vmatpush1.msra.mxu0 0.0
    %1083 = vmatprep.subr.mxu0 0.0
    %1084 = vmatpush1.msra.mxu0 0.0
    %1085 = vmatprep.subr.mxu0 0.0
    %1086 = vmatpush1.msra.mxu0 0.0
    %1087 = vmatprep.subr.mxu0 0.0
    %1088 = vmatpush1.msra.mxu0 0.0
    %1089 = vmatprep.subr.mxu0 0.0
    %1090 = vmatpush1.msra.mxu0 0.0
    %1091 = vmatprep.subr.mxu0 0.0
    %1092 = vmatpush1.msra.mxu0 0.0
    %1093 = vmatprep.subr.mxu0 0.0
    %1094 = vmatpush1.msra.mxu0 0.0
    %1095 = vmatprep.subr.mxu0 0.0
    %1096 = vmatpush1.msra.mxu0 0.0
    %1097 = vmatprep.subr.mxu0 0.0
    %1098 = vmatpush1.msra.mxu0 0.0
    %1099 = vmatprep.subr.mxu0 0.0
    %1100 = vmatpush1.msra.mxu0 0.0
    %1101 = vmatprep.subr.mxu0 0.0
    %1102 = vmatpush1.msra.mxu0 0.0
    %1103 = vmatprep.subr.mxu0 0.0
    %1104 = vmatpush1.msra.mxu0 0.0
    %1105 = vmatprep.subr.mxu0 0.0
    %1106 = vmatpush1.msra.mxu0 0.0
    %1107 = vmatprep.subr.mxu0 0.0
    %1108 = vmatpush1.msra.mxu0 0.0
    %1109 = vmatprep.subr.mxu0 0.0
    %1110 = vmatpush1.msra.mxu0 0.0
    %1111 = vmatprep.subr.mxu0 0.0
    %1112 = vmatpush1.msra.mxu0 0.0
    %1113 = vmatprep.subr.mxu0 0.0
    %1114 = vmatpush1.msra.mxu0 0.0
    %1115 = vmatprep.subr.mxu0 0.0
    %1116 = vmatpush1.msra.mxu0 0.0
    %1117 = vmatprep.mubr.f32.mxu0 0.0
    %1118 = vmatmul.mubr.f32.gmra.mrb[0].mxu0 %v1051
    %v1119 = vpop.f32.mrb[0].mxu0
    %v1120 = vadd.f32 0.0, %v1119
    %v1121 = vpop.f32.mrb[0].mxu0
    %1122 = vdwg.mxu0
    %v1124 = vsel %vm150, %v1049, 0
    %1126 = vmatprep.subr.mxu0 0.0
    %1127 = vmatpush1.msra.mxu0 %v819
    %1128 = vmatprep.subr.mxu0 0.0
    %1129 = vmatpush1.msra.mxu0 %v820
    %1130 = vmatprep.subr.mxu0 0.0
    %1131 = vmatpush1.msra.mxu0 0.0
    %1132 = vmatprep.subr.mxu0 0.0
    %1133 = vmatpush1.msra.mxu0 0.0
    %1134 = vmatprep.subr.mxu0 0.0
    %1135 = vmatpush1.msra.mxu0 0.0
    %1136 = vmatprep.subr.mxu0 0.0
    %1137 = vmatpush1.msra.mxu0 0.0
    %1138 = vmatprep.subr.mxu0 0.0
    %1139 = vmatpush1.msra.mxu0 0.0
    %1140 = vmatprep.subr.mxu0 0.0
    %1141 = vmatpush1.msra.mxu0 0.0
    %1142 = vmatprep.subr.mxu0 0.0
    %1143 = vmatpush1.msra.mxu0 0.0
    %1144 = vmatprep.subr.mxu0 0.0
    %1145 = vmatpush1.msra.mxu0 0.0
    %1146 = vmatprep.subr.mxu0 0.0
    %1147 = vmatpush1.msra.mxu0 0.0
    %1148 = vmatprep.subr.mxu0 0.0
    %1149 = vmatpush1.msra.mxu0 0.0
    %1150 = vmatprep.subr.mxu0 0.0
    %1151 = vmatpush1.msra.mxu0 0.0
    %1152 = vmatprep.subr.mxu0 0.0
    %1153 = vmatpush1.msra.mxu0 0.0
    %1154 = vmatprep.subr.mxu0 0.0
    %1155 = vmatpush1.msra.mxu0 0.0
    %1156 = vmatprep.subr.mxu0 0.0
    %1157 = vmatpush1.msra.mxu0 0.0
    %1158 = vmatprep.subr.mxu0 0.0
    %1159 = vmatpush1.msra.mxu0 0.0
    %1160 = vmatprep.subr.mxu0 0.0
    %1161 = vmatpush1.msra.mxu0 0.0
    %1162 = vmatprep.subr.mxu0 0.0
    %1163 = vmatpush1.msra.mxu0 0.0
    %1164 = vmatprep.subr.mxu0 0.0
    %1165 = vmatpush1.msra.mxu0 0.0
    %1166 = vmatprep.subr.mxu0 0.0
    %1167 = vmatpush1.msra.mxu0 0.0
    %1168 = vmatprep.subr.mxu0 0.0
    %1169 = vmatpush1.msra.mxu0 0.0
    %1170 = vmatprep.subr.mxu0 0.0
    %1171 = vmatpush1.msra.mxu0 0.0
    %1172 = vmatprep.subr.mxu0 0.0
    %1173 = vmatpush1.msra.mxu0 0.0
    %1174 = vmatprep.subr.mxu0 0.0
    %1175 = vmatpush1.msra.mxu0 0.0
    %1176 = vmatprep.subr.mxu0 0.0
    %1177 = vmatpush1.msra.mxu0 0.0
    %1178 = vmatprep.subr.mxu0 0.0
    %1179 = vmatpush1.msra.mxu0 0.0
    %1180 = vmatprep.subr.mxu0 0.0
    %1181 = vmatpush1.msra.mxu0 0.0
    %1182 = vmatprep.subr.mxu0 0.0
    %1183 = vmatpush1.msra.mxu0 0.0
    %1184 = vmatprep.subr.mxu0 0.0
    %1185 = vmatpush1.msra.mxu0 0.0
    %1186 = vmatprep.subr.mxu0 0.0
    %1187 = vmatpush1.msra.mxu0 0.0
    %1188 = vmatprep.subr.mxu0 0.0
    %1189 = vmatpush1.msra.mxu0 0.0
    %1190 = vmatprep.mubr.f32.mxu0 0.0
    %1191 = vmatmul.mubr.f32.gmra.mrb[0].mxu0 %v1124
    %v1192 = vpop.f32.mrb[0].mxu0
    %v1193 = vadd.f32 0.0, %v1192
    %v1194 = vpop.f32.mrb[0].mxu0
    %1195 = vdwg.mxu0
    %v1196 = vlaneseq
    %v1197 = vshrl.u32 %v1196, 7
    %v1198 = vsub.s32 3, %v1197
    %v1199 = vrot.slane %v109, %v1198
    %1200 = vmatprep.subr.mxu0 0.0
    %1201 = vmatpush1.xpose.msra.mxu0 %v822
    %1202 = vmatprep.subr.mxu0 0.0
    %1203 = vmatpush1.xpose.msra.mxu0 %v823
    %1204 = vmatprep.subr.mxu0 0.0
    %1205 = vmatpush1.xpose.msra.mxu0 %v824
    %1206 = vmatprep.subr.mxu0 0.0
    %1207 = vmatpush1.xpose.msra.mxu0 %v825
    %1208 = vmatprep.subr.mxu0 0.0
    %1209 = vmatpush1.xpose.msra.mxu0 %v826
    %1210 = vmatprep.subr.mxu0 0.0
    %1211 = vmatpush1.xpose.msra.mxu0 %v827
    %1212 = vmatprep.subr.mxu0 0.0
    %1213 = vmatpush1.xpose.msra.mxu0 %v828
    %1214 = vmatprep.subr.mxu0 0.0
    %1215 = vmatpush1.xpose.msra.mxu0 %v829
    %1216 = vmatprep.subr.mxu0 0.0
    %1217 = vmatpush1.xpose.msra.mxu0 %v830
    %1218 = vmatprep.subr.mxu0 0.0
    %1219 = vmatpush1.xpose.msra.mxu0 %v831
    %1220 = vmatprep.subr.mxu0 0.0
    %1221 = vmatpush1.xpose.msra.mxu0 %v832
    %1222 = vmatprep.subr.mxu0 0.0
    %1223 = vmatpush1.xpose.msra.mxu0 %v833
    %1224 = vmatprep.subr.mxu0 0.0
    %1225 = vmatpush1.xpose.msra.mxu0 %v834
    %1226 = vmatprep.subr.mxu0 0.0
    %1227 = vmatpush1.xpose.msra.mxu0 %v835
    %1228 = vmatprep.subr.mxu0 0.0
    %1229 = vmatpush1.xpose.msra.mxu0 %v836
    %1230 = vmatprep.subr.mxu0 0.0
    %1231 = vmatpush1.xpose.msra.mxu0 %v837
    %1232 = vmatprep.subr.mxu0 0.0
    %1233 = vmatpush1.xpose.msra.mxu0 0.0
    %1234 = vmatprep.subr.mxu0 0.0
    %1235 = vmatpush1.xpose.msra.mxu0 0.0
    %1236 = vmatprep.subr.mxu0 0.0
    %1237 = vmatpush1.xpose.msra.mxu0 0.0
    %1238 = vmatprep.subr.mxu0 0.0
    %1239 = vmatpush1.xpose.msra.mxu0 0.0
    %1240 = vmatprep.subr.mxu0 0.0
    %1241 = vmatpush1.xpose.msra.mxu0 0.0
    %1242 = vmatprep.subr.mxu0 0.0
    %1243 = vmatpush1.xpose.msra.mxu0 0.0
    %1244 = vmatprep.subr.mxu0 0.0
    %1245 = vmatpush1.xpose.msra.mxu0 0.0
    %1246 = vmatprep.subr.mxu0 0.0
    %1247 = vmatpush1.xpose.msra.mxu0 0.0
    %1248 = vmatprep.subr.mxu0 0.0
    %1249 = vmatpush1.xpose.msra.mxu0 0.0
    %1250 = vmatprep.subr.mxu0 0.0
    %1251 = vmatpush1.xpose.msra.mxu0 0.0
    %1252 = vmatprep.subr.mxu0 0.0
    %1253 = vmatpush1.xpose.msra.mxu0 0.0
    %1254 = vmatprep.subr.mxu0 0.0
    %1255 = vmatpush1.xpose.msra.mxu0 0.0
    %1256 = vmatprep.subr.mxu0 0.0
    %1257 = vmatpush1.xpose.msra.mxu0 0.0
    %1258 = vmatprep.subr.mxu0 0.0
    %1259 = vmatpush1.xpose.msra.mxu0 0.0
    %1260 = vmatprep.subr.mxu0 0.0
    %1261 = vmatpush1.xpose.msra.mxu0 0.0
    %1262 = vmatprep.subr.mxu0 0.0
    %1263 = vmatpush1.xpose.msra.mxu0 0.0
    %1264 = vmatprep.mubr.f32.mxu0 0.0
    %1265 = vmatmul.mubr.f32.gmra.mrb[0].mxu0 %v1120
    %v1266 = vpop.f32.mrb[0].mxu0
    %v1267 = vadd.f32 %v1199, %v1266
    %v1268 = vpop.f32.mrb[0].mxu0
    %1269 = vmatprep.mubr.f32.mxu0 0.0
    %1270 = vmatmul.mubr.f32.gmra.mrb[0].mxu0 %v1193
    %v1271 = vpop.f32.mrb[0].mxu0
    %v1272 = vadd.f32 %v1199, %v1271
    %v1273 = vpop.f32.mrb[0].mxu0
    %1274 = vdwg.mxu0
    %v1275 = vadd.f32 %v1267, %v1272
    %v1276 = vrot.slane %v1275, 4
    %v1277 = vadd.f32 %v1275, %v1276
    %v1278 = vrot.slane %v1277, 2
    %v1279 = vadd.f32 %v1277, %v1278
    %v1280 = vrot.slane %v1279, 1
    %v1281 = vadd.f32 %v1279, %v1280
    %v1282 = vmul.f32 %v1281, 0.0625
    %v1283 = vsub.f32 %v1267, %v1282
    %v1284 = vsub.f32 %v1272, %v1282
    %v1285 = vmul.f32 %v1283, %v1283
    %v1286 = vmul.f32 %v1284, %v1284
    %v1287 = vadd.f32 %v1285, %v1286
    %v1288 = vrot.slane %v1287, 4
    %v1289 = vadd.f32 %v1287, %v1288
    %v1290 = vrot.slane %v1289, 2
    %v1291 = vadd.f32 %v1289, %v1290
    %v1292 = vrot.slane %v1291, 1
    %v1293 = vadd.f32 %v1291, %v1292
    %v1294 = vmul.f32 %v1293, 0.0625
    %v1295 = vadd.f32 %v1294, 1e-05
    %v1296 = vrsqrt.pop %v1295
    %v1297 = vmul.f32 %v1295, %v1296
    %vm1298 = vcmp.eq.f32.partialorder %v1295, inf
    %v1299 = vsel %vm1298, %v1295, %v1297
    %vm1300 = vcmp.eq.f32.partialorder %v1295, 0.0
    %v1301 = vand.u32 %v1295, 2147483648
    %v1302 = vsel %vm1300, %v1301, %v1299
    %v1303 = vrcp.pop %v1302
    %v1304 = vmul.f32 1.0, %v1303
    %v1305 = vmul.f32 %v1304, %v109
    %v1306 = vlaneseq
    %v1307 = vshrl.u32 %v1306, 7
    %v1308 = vsub.s32 4, %v1307
    %v1309 = vrot.slane %v1305, %v1308
    %v1310 = vmul.f32 %v1283, %v1309
    %v1311 = vmul.f32 %v1284, %v1309
    %v1312 = vlaneseq
    %v1313 = vshrl.u32 %v1312, 7
    %v1314 = vsub.s32 5, %v1313
    %v1315 = vrot.slane %v109, %v1314
    %v1316 = vadd.f32 %v1310, %v1315
    %v1317 = vadd.f32 %v1311, %v1315
    %v1318 = vmax.f32 %v1316, 0.0
    %v1319 = vmax.f32 %v1317, 0.0
    %v1320 = vld [vmem:[%s5] sm:$0xff]
    %v1321 = vld [vmem:[%s5 + $0x8] sm:$0xff]
    %1322 = vrot.lane.b32.xlu0 %v145, 8
    %v1323 = vpop.permute.xlu0 %1322
    %vm1325 = vcmask 64512
    %v1326 = vsel %vm1325, %v144, %v1323
    %1327 = vmatprep.subr.mxu0 0.0
    %1328 = vmatpush1.xpose.msra.mxu0 %v1318
    %1329 = vmatprep.subr.mxu0 0.0
    %1330 = vmatpush1.xpose.msra.mxu0 %v1319
    %1331 = vmatprep.subr.mxu0 0.0
    %1332 = vmatpush1.xpose.msra.mxu0 0.0
    %1333 = vmatprep.subr.mxu0 0.0
    %1334 = vmatpush1.xpose.msra.mxu0 0.0
    %1335 = vmatprep.subr.mxu0 0.0
    %1336 = vmatpush1.xpose.msra.mxu0 0.0
    %1337 = vmatprep.subr.mxu0 0.0
    %1338 = vmatpush1.xpose.msra.mxu0 0.0
    %1339 = vmatprep.subr.mxu0 0.0
    %1340 = vmatpush1.xpose.msra.mxu0 0.0
    %1341 = vmatprep.subr.mxu0 0.0
    %1342 = vmatpush1.xpose.msra.mxu0 0.0
    %1343 = vmatprep.subr.mxu0 0.0
    %1344 = vmatpush1.xpose.msra.mxu0 0.0
    %1345 = vmatprep.subr.mxu0 0.0
    %1346 = vmatpush1.xpose.msra.mxu0 0.0
    %1347 = vmatprep.subr.mxu0 0.0
    %1348 = vmatpush1.xpose.msra.mxu0 0.0
    %1349 = vmatprep.subr.mxu0 0.0
    %1350 = vmatpush1.xpose.msra.mxu0 0.0
    %1351 = vmatprep.subr.mxu0 0.0
    %1352 = vmatpush1.xpose.msra.mxu0 0.0
    %1353 = vmatprep.subr.mxu0 0.0
    %1354 = vmatpush1.xpose.msra.mxu0 0.0
    %1355 = vmatprep.subr.mxu0 0.0
    %1356 = vmatpush1.xpose.msra.mxu0 0.0
    %1357 = vmatprep.subr.mxu0 0.0
    %1358 = vmatpush1.xpose.msra.mxu0 0.0
    %1359 = vmatprep.subr.mxu0 0.0
    %1360 = vmatpush1.xpose.msra.mxu0 0.0
    %1361 = vmatprep.subr.mxu0 0.0
    %1362 = vmatpush1.xpose.msra.mxu0 0.0
    %1363 = vmatprep.subr.mxu0 0.0
    %1364 = vmatpush1.xpose.msra.mxu0 0.0
    %1365 = vmatprep.subr.mxu0 0.0
    %1366 = vmatpush1.xpose.msra.mxu0 0.0
    %1367 = vmatprep.subr.mxu0 0.0
    %1368 = vmatpush1.xpose.msra.mxu0 0.0
    %1369 = vmatprep.subr.mxu0 0.0
    %1370 = vmatpush1.xpose.msra.mxu0 0.0
    %1371 = vmatprep.subr.mxu0 0.0
    %1372 = vmatpush1.xpose.msra.mxu0 0.0
    %1373 = vmatprep.subr.mxu0 0.0
    %1374 = vmatpush1.xpose.msra.mxu0 0.0
    %1375 = vmatprep.subr.mxu0 0.0
    %1376 = vmatpush1.xpose.msra.mxu0 0.0
    %1377 = vmatprep.subr.mxu0 0.0
    %1378 = vmatpush1.xpose.msra.mxu0 0.0
    %1379 = vmatprep.subr.mxu0 0.0
    %1380 = vmatpush1.xpose.msra.mxu0 0.0
    %1381 = vmatprep.subr.mxu0 0.0
    %1382 = vmatpush1.xpose.msra.mxu0 0.0
    %1383 = vmatprep.subr.mxu0 0.0
    %1384 = vmatpush1.xpose.msra.mxu0 0.0
    %1385 = vmatprep.subr.mxu0 0.0
    %1386 = vmatpush1.xpose.msra.mxu0 0.0
    %1387 = vmatprep.subr.mxu0 0.0
    %1388 = vmatpush1.xpose.msra.mxu0 0.0
    %1389 = vmatprep.subr.mxu0 0.0
    %1390 = vmatpush1.xpose.msra.mxu0 0.0
    %1391 = vmatprep.mubr.f32.mxu0 0.0
    %1392 = vmatmul.mubr.f32.gmra.mrb[0].mxu0 %v1320
    %v1393 = vpop.f32.mrb[0].mxu0
    %v1394 = vadd.f32 %v1326, %v1393
    %v1395 = vpop.f32.mrb[0].mxu0
    %1396 = vmatprep.mubr.f32.mxu0 0.0
    %1397 = vmatmul.mubr.f32.gmra.mrb[0].mxu0 %v1321
    %v1398 = vpop.f32.mrb[0].mxu0
    %v1399 = vadd.f32 %v1326, %v1398
    %v1400 = vpop.f32.mrb[0].mxu0
    %1401 = vdwg.mxu0
    %1404 = vrot.lane.b32.xlu0 %v1394, 120
    %v1405 = vpop.permute.xlu0 %1404
    %1406 = vrot.lane.b32.xlu0 %v1399, 120
    %v1407 = vpop.permute.xlu0 %1406
    %v1410 = vcombine.high %v1394, 0.0
    %v1412 = vunpack.c.l.s4 1983009808
    %v1413 = vunpack.c.0.s8 %v1412
    %v1414 = vlaneseq
    %v1415 = vshrl.u32 %v1414, 7
    %v1416 = vsub.s32 %v1413, %v1415
    %v1417 = vrot.slane %v1394, %v1416
    %v1419 = vunpack.c.l.s4 1983009808
    %v1420 = vunpack.c.0.s8 %v1419
    %v1421 = vlaneseq
    %v1422 = vshrl.u32 %v1421, 7
    %v1423 = vsub.s32 %v1420, %v1422
    %v1424 = vrot.slane %v1410, %v1423
    %v1425 = vcombine.high %v1405, 0.0
    %v1427 = vunpack.c.l.s4 1983009808
    %v1428 = vunpack.c.0.s8 %v1427
    %v1429 = vlaneseq
    %v1430 = vshrl.u32 %v1429, 7
    %v1431 = vsub.s32 %v1428, %v1430
    %v1432 = vrot.slane %v1405, %v1431
    %v1434 = vunpack.c.l.s4 1983009808
    %v1435 = vunpack.c.0.s8 %v1434
    %v1436 = vlaneseq
    %v1437 = vshrl.u32 %v1436, 7
    %v1438 = vsub.s32 %v1435, %v1437
    %v1439 = vrot.slane %v1425, %v1438
    %v1440 = vcombine.low %v1417, %v1432
    %v1441 = vcombine.high %v1417, %v1432
    %v1443 = vunpack.c.l.s4 1934713408
    %v1444 = vunpack.c.0.s8 %v1443
    %v1445 = vlaneseq
    %v1446 = vshrl.u32 %v1445, 7
    %v1447 = vsub.s32 %v1444, %v1446
    %v1448 = vrot.slane %v1440, %v1447
    %v1450 = vunpack.c.l.s4 1934713408
    %v1451 = vunpack.c.0.s8 %v1450
    %v1452 = vlaneseq
    %v1453 = vshrl.u32 %v1452, 7
    %v1454 = vsub.s32 %v1451, %v1453
    %v1455 = vrot.slane %v1441, %v1454
    %v1456 = vcombine.low %v1424, %v1439
    %v1457 = vcombine.high %v1424, %v1439
    %v1459 = vunpack.c.l.s4 1934713408
    %v1460 = vunpack.c.0.s8 %v1459
    %v1461 = vlaneseq
    %v1462 = vshrl.u32 %v1461, 7
    %v1463 = vsub.s32 %v1460, %v1462
    %v1464 = vrot.slane %v1456, %v1463
    %v1466 = vunpack.c.l.s4 1934713408
    %v1467 = vunpack.c.0.s8 %v1466
    %v1468 = vlaneseq
    %v1469 = vshrl.u32 %v1468, 7
    %v1470 = vsub.s32 %v1467, %v1469
    %v1471 = vrot.slane %v1457, %v1470
    %v1472 = vcombine.high %v1448, 0.0
    %v1473 = vcombine.high %v1455, 0.0
    %v1474 = vcombine.high %v1464, 0.0
    %v1475 = vcombine.high %v1471, 0.0
    %v1476 = vcombine.high %v1399, 0.0
    %v1478 = vunpack.c.l.s4 1983009808
    %v1479 = vunpack.c.0.s8 %v1478
    %v1480 = vlaneseq
    %v1481 = vshrl.u32 %v1480, 7
    %v1482 = vsub.s32 %v1479, %v1481
    %v1483 = vrot.slane %v1399, %v1482
    %v1485 = vunpack.c.l.s4 1983009808
    %v1486 = vunpack.c.0.s8 %v1485
    %v1487 = vlaneseq
    %v1488 = vshrl.u32 %v1487, 7
    %v1489 = vsub.s32 %v1486, %v1488
    %v1490 = vrot.slane %v1476, %v1489
    %v1491 = vcombine.high %v1407, 0.0
    %v1493 = vunpack.c.l.s4 1983009808
    %v1494 = vunpack.c.0.s8 %v1493
    %v1495 = vlaneseq
    %v1496 = vshrl.u32 %v1495, 7
    %v1497 = vsub.s32 %v1494, %v1496
    %v1498 = vrot.slane %v1407, %v1497
    %v1500 = vunpack.c.l.s4 1983009808
    %v1501 = vunpack.c.0.s8 %v1500
    %v1502 = vlaneseq
    %v1503 = vshrl.u32 %v1502, 7
    %v1504 = vsub.s32 %v1501, %v1503
    %v1505 = vrot.slane %v1491, %v1504
    %v1506 = vcombine.low %v1483, %v1498
    %v1507 = vcombine.high %v1483, %v1498
    %v1509 = vunpack.c.l.s4 1934713408
    %v1510 = vunpack.c.0.s8 %v1509
    %v1511 = vlaneseq
    %v1512 = vshrl.u32 %v1511, 7
    %v1513 = vsub.s32 %v1510, %v1512
    %v1514 = vrot.slane %v1506, %v1513
    %v1516 = vunpack.c.l.s4 1934713408
    %v1517 = vunpack.c.0.s8 %v1516
    %v1518 = vlaneseq
    %v1519 = vshrl.u32 %v1518, 7
    %v1520 = vsub.s32 %v1517, %v1519
    %v1521 = vrot.slane %v1507, %v1520
    %v1522 = vcombine.low %v1490, %v1505
    %v1523 = vcombine.high %v1490, %v1505
    %v1525 = vunpack.c.l.s4 1934713408
    %v1526 = vunpack.c.0.s8 %v1525
    %v1527 = vlaneseq
    %v1528 = vshrl.u32 %v1527, 7
    %v1529 = vsub.s32 %v1526, %v1528
    %v1530 = vrot.slane %v1522, %v1529
    %v1532 = vunpack.c.l.s4 1934713408
    %v1533 = vunpack.c.0.s8 %v1532
    %v1534 = vlaneseq
    %v1535 = vshrl.u32 %v1534, 7
    %v1536 = vsub.s32 %v1533, %v1535
    %v1537 = vrot.slane %v1523, %v1536
    %v1538 = vcombine.high %v1514, 0.0
    %v1539 = vcombine.high %v1521, 0.0
    %v1540 = vcombine.high %v1530, 0.0
    %v1541 = vcombine.high %v1537, 0.0
    %v1542 = vcombine.low %v1448, %v1455
    %v1544 = vunpack.c.l.s4 1983009808
    %v1545 = vunpack.c.0.s8 %v1544
    %v1546 = vlaneseq
    %v1547 = vshrl.u32 %v1546, 7
    %v1548 = vsub.s32 %v1545, %v1547
    %v1549 = vrot.slane %v1542, %v1548
    %v1550 = vcombine.low %v1472, %v1473
    %v1552 = vunpack.c.l.s4 1983009808
    %v1553 = vunpack.c.0.s8 %v1552
    %v1554 = vlaneseq
    %v1555 = vshrl.u32 %v1554, 7
    %v1556 = vsub.s32 %v1553, %v1555
    %v1557 = vrot.slane %v1550, %v1556
    %v1558 = vcombine.low %v1464, %v1471
    %v1560 = vunpack.c.l.s4 1983009808
    %v1561 = vunpack.c.0.s8 %v1560
    %v1562 = vlaneseq
    %v1563 = vshrl.u32 %v1562, 7
    %v1564 = vsub.s32 %v1561, %v1563
    %v1565 = vrot.slane %v1558, %v1564
    %v1566 = vcombine.low %v1474, %v1475
    %v1568 = vunpack.c.l.s4 1983009808
    %v1569 = vunpack.c.0.s8 %v1568
    %v1570 = vlaneseq
    %v1571 = vshrl.u32 %v1570, 7
    %v1572 = vsub.s32 %v1569, %v1571
    %v1573 = vrot.slane %v1566, %v1572
    %v1574 = vcombine.low %v1549, %v1557
    %v1576 = vunpack.c.l.s4 1934713408
    %v1577 = vunpack.c.0.s8 %v1576
    %v1578 = vlaneseq
    %v1579 = vshrl.u32 %v1578, 7
    %v1580 = vsub.s32 %v1577, %v1579
    %v1581 = vrot.slane %v1574, %v1580
    %v1582 = vcombine.low %v1565, %v1573
    %v1584 = vunpack.c.l.s4 1934713408
    %v1585 = vunpack.c.0.s8 %v1584
    %v1586 = vlaneseq
    %v1587 = vshrl.u32 %v1586, 7
    %v1588 = vsub.s32 %v1585, %v1587
    %v1589 = vrot.slane %v1582, %v1588
    %v1590 = vcombine.low %v1581, %v1589
    %v1591 = vcombine.high %v1581, %v1589
    %v1592 = vcombine.low %v1514, %v1521
    %v1594 = vunpack.c.l.s4 1983009808
    %v1595 = vunpack.c.0.s8 %v1594
    %v1596 = vlaneseq
    %v1597 = vshrl.u32 %v1596, 7
    %v1598 = vsub.s32 %v1595, %v1597
    %v1599 = vrot.slane %v1592, %v1598
    %v1600 = vcombine.low %v1538, %v1539
    %v1602 = vunpack.c.l.s4 1983009808
    %v1603 = vunpack.c.0.s8 %v1602
    %v1604 = vlaneseq
    %v1605 = vshrl.u32 %v1604, 7
    %v1606 = vsub.s32 %v1603, %v1605
    %v1607 = vrot.slane %v1600, %v1606
    %v1608 = vcombine.low %v1530, %v1537
    %v1610 = vunpack.c.l.s4 1983009808
    %v1611 = vunpack.c.0.s8 %v1610
    %v1612 = vlaneseq
    %v1613 = vshrl.u32 %v1612, 7
    %v1614 = vsub.s32 %v1611, %v1613
    %v1615 = vrot.slane %v1608, %v1614
    %v1616 = vcombine.low %v1540, %v1541
    %v1618 = vunpack.c.l.s4 1983009808
    %v1619 = vunpack.c.0.s8 %v1618
    %v1620 = vlaneseq
    %v1621 = vshrl.u32 %v1620, 7
    %v1622 = vsub.s32 %v1619, %v1621
    %v1623 = vrot.slane %v1616, %v1622
    %v1624 = vcombine.low %v1599, %v1607
    %v1626 = vunpack.c.l.s4 1934713408
    %v1627 = vunpack.c.0.s8 %v1626
    %v1628 = vlaneseq
    %v1629 = vshrl.u32 %v1628, 7
    %v1630 = vsub.s32 %v1627, %v1629
    %v1631 = vrot.slane %v1624, %v1630
    %v1632 = vcombine.low %v1615, %v1623
    %v1634 = vunpack.c.l.s4 1934713408
    %v1635 = vunpack.c.0.s8 %v1634
    %v1636 = vlaneseq
    %v1637 = vshrl.u32 %v1636, 7
    %v1638 = vsub.s32 %v1635, %v1637
    %v1639 = vrot.slane %v1632, %v1638
    %v1640 = vcombine.low %v1631, %v1639
    %v1641 = vcombine.high %v1631, %v1639
    %v1642 = vsel %vm1325, %v1590, -inf
    %1643 = vmax.xlane.f32.xlu0 %v1642
    %v1644 = vpop.xlane.xlu0 %1643
    %v1645 = vsel %vm1325, %v1640, -inf
    %1646 = vmax.xlane.f32.xlu0 %v1645
    %v1647 = vpop.xlane.xlu0 %1646
    %v1648 = vsel %vm1325, %v1591, -inf
    %1649 = vmax.xlane.f32.xlu0 %v1648
    %v1650 = vpop.xlane.xlu0 %1649
    %v1651 = vsel %vm1325, %v1641, -inf
    %1652 = vmax.xlane.f32.xlu0 %v1651
    %v1653 = vpop.xlane.xlu0 %1652
    %v1654 = vsub.f32 %v1590, %v1644
    %v1655 = vsub.f32 %v1640, %v1647
    %v1656 = vsub.f32 %v1591, %v1650
    %v1657 = vsub.f32 %v1641, %v1653
    %v1658 = vmul.f32 %v1654, 1.442695
    %v1659 = vpow.pop %v1658
    %v1660 = vmul.f32 %v1655, 1.442695
    %v1661 = vpow.pop %v1660
    %v1662 = vmul.f32 %v1656, 1.442695
    %v1663 = vpow.pop %v1662
    %v1664 = vmul.f32 %v1657, 1.442695
    %v1665 = vpow.pop %v1664
    %v1666 = vsel %vm1325, %v1659, 0.0
    %1667 = vadd.xlane.f32.xlu0 %v1666
    %v1668 = vpop.xlane.xlu0 %1667
    %v1669 = vsel %vm1325, %v1661, 0.0
    %1670 = vadd.xlane.f32.xlu0 %v1669
    %v1671 = vpop.xlane.xlu0 %1670
    %v1672 = vsel %vm1325, %v1663, 0.0
    %1673 = vadd.xlane.f32.xlu0 %v1672
    %v1674 = vpop.xlane.xlu0 %1673
    %v1675 = vsel %vm1325, %v1665, 0.0
    %1676 = vadd.xlane.f32.xlu0 %v1675
    %v1677 = vpop.xlane.xlu0 %1676
    %v1678 = vrcp.pop %v1668
    %v1679 = vmul.f32 %v1659, %v1678
    %v1680 = vrcp.pop %v1671
    %v1681 = vmul.f32 %v1661, %v1680
    %v1682 = vrcp.pop %v1674
    %v1683 = vmul.f32 %v1663, %v1682
    %v1684 = vrcp.pop %v1677
    %v1685 = vmul.f32 %v1665, %v1684
    %v1687 = vsel %vm1325, %v1679, 0
    %v1690 = vsel %vm1325, %v1681, 0
    %1692 = vmatprep.subr.mxu0 0.0
    %1693 = vmatpush1.msra.mxu0 %v1318
    %1694 = vmatprep.subr.mxu0 0.0
    %1695 = vmatpush1.msra.mxu0 0.0
    %1696 = vmatprep.subr.mxu0 0.0
    %1697 = vmatpush1.msra.mxu0 0.0
    %1698 = vmatprep.subr.mxu0 0.0
    %1699 = vmatpush1.msra.mxu0 0.0
    %1700 = vmatprep.subr.mxu0 0.0
    %1701 = vmatpush1.msra.mxu0 0.0
    %1702 = vmatprep.subr.mxu0 0.0
    %1703 = vmatpush1.msra.mxu0 0.0
    %1704 = vmatprep.subr.mxu0 0.0
    %1705 = vmatpush1.msra.mxu0 0.0
    %1706 = vmatprep.subr.mxu0 0.0
    %1707 = vmatpush1.msra.mxu0 0.0
    %1708 = vmatprep.subr.mxu0 0.0
    %1709 = vmatpush1.msra.mxu0 0.0
    %1710 = vmatprep.subr.mxu0 0.0
    %1711 = vmatpush1.msra.mxu0 0.0
    %1712 = vmatprep.subr.mxu0 0.0
    %1713 = vmatpush1.msra.mxu0 0.0
    %1714 = vmatprep.subr.mxu0 0.0
    %1715 = vmatpush1.msra.mxu0 0.0
    %1716 = vmatprep.subr.mxu0 0.0
    %1717 = vmatpush1.msra.mxu0 0.0
    %1718 = vmatprep.subr.mxu0 0.0
    %1719 = vmatpush1.msra.mxu0 0.0
    %1720 = vmatprep.subr.mxu0 0.0
    %1721 = vmatpush1.msra.mxu0 0.0
    %1722 = vmatprep.subr.mxu0 0.0
    %1723 = vmatpush1.msra.mxu0 0.0
    %1724 = vmatprep.subr.mxu0 0.0
    %1725 = vmatpush1.msra.mxu0 0.0
    %1726 = vmatprep.subr.mxu0 0.0
    %1727 = vmatpush1.msra.mxu0 0.0
    %1728 = vmatprep.subr.mxu0 0.0
    %1729 = vmatpush1.msra.mxu0 0.0
    %1730 = vmatprep.subr.mxu0 0.0
    %1731 = vmatpush1.msra.mxu0 0.0
    %1732 = vmatprep.subr.mxu0 0.0
    %1733 = vmatpush1.msra.mxu0 0.0
    %1734 = vmatprep.subr.mxu0 0.0
    %1735 = vmatpush1.msra.mxu0 0.0
    %1736 = vmatprep.subr.mxu0 0.0
    %1737 = vmatpush1.msra.mxu0 0.0
    %1738 = vmatprep.subr.mxu0 0.0
    %1739 = vmatpush1.msra.mxu0 0.0
    %1740 = vmatprep.subr.mxu0 0.0
    %1741 = vmatpush1.msra.mxu0 0.0
    %1742 = vmatprep.subr.mxu0 0.0
    %1743 = vmatpush1.msra.mxu0 0.0
    %1744 = vmatprep.subr.mxu0 0.0
    %1745 = vmatpush1.msra.mxu0 0.0
    %1746 = vmatprep.subr.mxu0 0.0
    %1747 = vmatpush1.msra.mxu0 0.0
    %1748 = vmatprep.subr.mxu0 0.0
    %1749 = vmatpush1.msra.mxu0 0.0
    %1750 = vmatprep.subr.mxu0 0.0
    %1751 = vmatpush1.msra.mxu0 0.0
    %1752 = vmatprep.subr.mxu0 0.0
    %1753 = vmatpush1.msra.mxu0 0.0
    %1754 = vmatprep.subr.mxu0 0.0
    %1755 = vmatpush1.msra.mxu0 0.0
    %1756 = vmatprep.mubr.f32.mxu0 0.0
    %1757 = vmatmul.mubr.f32.gmra.mrb[0].mxu0 %v1687
    %v1758 = vpop.f32.mrb[0].mxu0
    %v1759 = vadd.f32 0.0, %v1758
    %v1760 = vpop.f32.mrb[0].mxu0
    %1761 = vmatprep.mubr.f32.mxu0 0.0
    %1762 = vmatmul.mubr.f32.gmra.mrb[0].mxu0 %v1690
    %v1763 = vpop.f32.mrb[0].mxu0
    %v1764 = vadd.f32 0.0, %v1763
    %v1765 = vpop.f32.mrb[0].mxu0
    %1766 = vdwg.mxu0
    %v1768 = vsel %vm1325, %v1683, 0
    %v1771 = vsel %vm1325, %v1685, 0
    %1773 = vmatprep.subr.mxu0 0.0
    %1774 = vmatpush1.msra.mxu0 %v1319
    %1775 = vmatprep.subr.mxu0 0.0
    %1776 = vmatpush1.msra.mxu0 0.0
    %1777 = vmatprep.subr.mxu0 0.0
    %1778 = vmatpush1.msra.mxu0 0.0
    %1779 = vmatprep.subr.mxu0 0.0
    %1780 = vmatpush1.msra.mxu0 0.0
    %1781 = vmatprep.subr.mxu0 0.0
    %1782 = vmatpush1.msra.mxu0 0.0
    %1783 = vmatprep.subr.mxu0 0.0
    %1784 = vmatpush1.msra.mxu0 0.0
    %1785 = vmatprep.subr.mxu0 0.0
    %1786 = vmatpush1.msra.mxu0 0.0
    %1787 = vmatprep.subr.mxu0 0.0
    %1788 = vmatpush1.msra.mxu0 0.0
    %1789 = vmatprep.subr.mxu0 0.0
    %1790 = vmatpush1.msra.mxu0 0.0
    %1791 = vmatprep.subr.mxu0 0.0
    %1792 = vmatpush1.msra.mxu0 0.0
    %1793 = vmatprep.subr.mxu0 0.0
    %1794 = vmatpush1.msra.mxu0 0.0
    %1795 = vmatprep.subr.mxu0 0.0
    %1796 = vmatpush1.msra.mxu0 0.0
    %1797 = vmatprep.subr.mxu0 0.0
    %1798 = vmatpush1.msra.mxu0 0.0
    %1799 = vmatprep.subr.mxu0 0.0
    %1800 = vmatpush1.msra.mxu0 0.0
    %1801 = vmatprep.subr.mxu0 0.0
    %1802 = vmatpush1.msra.mxu0 0.0
    %1803 = vmatprep.subr.mxu0 0.0
    %1804 = vmatpush1.msra.mxu0 0.0
    %1805 = vmatprep.subr.mxu0 0.0
    %1806 = vmatpush1.msra.mxu0 0.0
    %1807 = vmatprep.subr.mxu0 0.0
    %1808 = vmatpush1.msra.mxu0 0.0
    %1809 = vmatprep.subr.mxu0 0.0
    %1810 = vmatpush1.msra.mxu0 0.0
    %1811 = vmatprep.subr.mxu0 0.0
    %1812 = vmatpush1.msra.mxu0 0.0
    %1813 = vmatprep.subr.mxu0 0.0
    %1814 = vmatpush1.msra.mxu0 0.0
    %1815 = vmatprep.subr.mxu0 0.0
    %1816 = vmatpush1.msra.mxu0 0.0
    %1817 = vmatprep.subr.mxu0 0.0
    %1818 = vmatpush1.msra.mxu0 0.0
    %1819 = vmatprep.subr.mxu0 0.0
    %1820 = vmatpush1.msra.mxu0 0.0
    %1821 = vmatprep.subr.mxu0 0.0
    %1822 = vmatpush1.msra.mxu0 0.0
    %1823 = vmatprep.subr.mxu0 0.0
    %1824 = vmatpush1.msra.mxu0 0.0
    %1825 = vmatprep.subr.mxu0 0.0
    %1826 = vmatpush1.msra.mxu0 0.0
    %1827 = vmatprep.subr.mxu0 0.0
    %1828 = vmatpush1.msra.mxu0 0.0
    %1829 = vmatprep.subr.mxu0 0.0
    %1830 = vmatpush1.msra.mxu0 0.0
    %1831 = vmatprep.subr.mxu0 0.0
    %1832 = vmatpush1.msra.mxu0 0.0
    %1833 = vmatprep.subr.mxu0 0.0
    %1834 = vmatpush1.msra.mxu0 0.0
    %1835 = vmatprep.subr.mxu0 0.0
    %1836 = vmatpush1.msra.mxu0 0.0
    %1837 = vmatprep.mubr.f32.mxu0 0.0
    %1838 = vmatmul.mubr.f32.gmra.mrb[0].mxu0 %v1768
    %v1839 = vpop.f32.mrb[0].mxu0
    %v1840 = vadd.f32 0.0, %v1839
    %v1841 = vpop.f32.mrb[0].mxu0
    %1842 = vmatprep.mubr.f32.mxu0 0.0
    %1843 = vmatmul.mubr.f32.gmra.mrb[0].mxu0 %v1771
    %v1844 = vpop.f32.mrb[0].mxu0
    %v1845 = vadd.f32 0.0, %v1844
    %v1846 = vpop.f32.mrb[0].mxu0
    %1847 = vdwg.mxu0
    %1848 = vst [vmem:[#allocation13] sm:$0xff] %v1759
    %1849 = vst [vmem:[#allocation13 + $0x8] sm:$0xff] %v1764
    %1850 = vst [vmem:[#allocation13 + $0x10] sm:$0xff] %v1840
    %1851 = vst [vmem:[#allocation13 + $0x18] sm:$0xff] %v1845
    // Predicated region
    $region54: #{tpu_custom_call.1} parent=1 // pred_check
      _
    $region55: #{tpu_custom_call.1} parent=1 // pred_check_branch
      %1853 = sbr.rel (0) target = $region57
    $region56: #{tpu_custom_call.1} parent=1 // pred_region
      %s1855 = ssub.s32 512, 512
      %1856 = vsyncadd [#allocation4], %s1855
      %s1857 = sshll.u32 [#allocation13], 4
      %s1858 = int_to_ptr.vmem [resolvable:$true] %s1857
      %1863 = dma.vmem_to_hbm [thread:$0]  %s1858, 512, %s7, [#allocation4], 128, 128, 8
    $region57: #{tpu_custom_call.1} parent=1 // pred_fallthru
      _
    // Predicated region
    $region58: #{tpu_custom_call.1} parent=1 // pred_check
      _
    $region59: #{tpu_custom_call.1} parent=1 // pred_check_branch
      %1865 = sbr.rel (0) target = $region61
    $region60: #{tpu_custom_call.1} parent=1 // pred_region
      %1866 = dma.done [#allocation4], 512
    $region61: #{tpu_custom_call.1} parent=1 // pred_fallthru
      _
    %1867 = vsyncpa [#allocation3], 1
    %1868 = vsyncpa [#allocation6], 1
    %1869 = vsyncpa [#allocation9], 1
    %1870 = vsyncpa [#allocation12], 1
    %1871 = vsyncpa [#allocation4], 1

</llo_original>
